<compile_context>
chip_gen: v5e
topology: v5e:2x2
jax: 0.10.0
libtpu: 0.0.40
codegen_flags: <defaults>
</compile_context>

<pallas_src>
import functools

import jax
import jax.numpy as jnp
from jax import lax
from jax.experimental import pallas as pl
from jax.experimental.pallas import tpu as pltpu


def _lstm_stack_kernel(x_ref, wih0_ref, wihr_ref, whh_ref, b_ref,
                       h0_ref, c0_ref,
                       y_ref, hn_ref, cn_ref,
                       hseq_sc, gx_sc, h_sc, c_sc,
                       *, hidden_size: int, num_layers: int, time_chunk: int,
                       batch: int, seq_len: int, mxu_dtype):
    """Fused multi-layer LSTM over one time chunk.

    grid = (ceil(T / Tc),) -- sequential ("arbitrary") over time chunks.
    x_ref   : (Tc*B, Din)   flattened input chunk (time-major rows)
    wih0_ref: (Din, 4H)     layer-0 input weights, gate cols (i, f, o, g)
    wihr_ref: (max(L-1,1), H, 4H)  input weights for layers > 0
    whh_ref : (L, H, 4H)    recurrent weights
    b_ref   : (L, 1, 4H)    b_ih + b_hh (f32)
    h0/c0   : (L, B, H)
    y_ref   : (Tc*B, H)
    hn/cn   : (L, B, H)
    hseq_sc : (Tc*B, H) f32 inter-layer sequence buffer (stays in VMEM)
    gx_sc   : (Tc*B, 4H) f32 hoisted input-projection buffer
    h_sc/c_sc: (L, B, H) f32 recurrent carry across time chunks
    """
    H = hidden_size
    B = batch
    Tc = time_chunk
    c_idx = pl.program_id(0)

    @pl.when(c_idx == 0)
    def _():
        h_sc[...] = h0_ref[...].astype(jnp.float32)
        c_sc[...] = c0_ref[...].astype(jnp.float32)

    has_tail = (seq_len % Tc) != 0          # static Python bool
    if has_tail:
        valid_t = jnp.minimum(Tc, seq_len - c_idx * Tc)

    for layer in range(num_layers):          # static, small
        # ---- hoisted bulk input projection (one MXU matmul per layer/chunk)
        if layer == 0:
            inp = x_ref[...].astype(mxu_dtype)          # (Tc*B, Din)
            w_in = wih0_ref[...]                        # (Din, 4H)
        else:
            inp = hseq_sc[...].astype(mxu_dtype)        # (Tc*B, H)
            w_in = wihr_ref[layer - 1]                  # (H, 4H)
        gx_sc[...] = (jnp.dot(inp, w_in, preferred_element_type=jnp.float32)
                      + b_ref[layer])                   # bias folded in here

        w_hh_l = whh_ref[layer]                         # (H, 4H)

        # ---- serial recurrence: one small dot + elementwise per step
        def step(t, carry, w_hh_l=w_hh_l):
            h, c = carry
            row = pl.multiple_of(t * B, B)
            gates = gx_sc[pl.ds(row, B), :] + jnp.dot(
                h.astype(mxu_dtype), w_hh_l,
                preferred_element_type=jnp.float32)     # (B, 4H)
            sig = jax.nn.sigmoid(gates[:, :3 * H])      # one contiguous slab
            i_g = sig[:, 0 * H:1 * H]
            f_g = sig[:, 1 * H:2 * H]
            o_g = sig[:, 2 * H:3 * H]
            g_g = jnp.tanh(gates[:, 3 * H:])
            c_new = f_g * c + i_g * g_g
            h_new = o_g * jnp.tanh(c_new)
            if has_tail:                                # only traced when needed
                keep = t < valid_t
                h_new = jnp.where(keep, h_new, h)
                c_new = jnp.where(keep, c_new, c)
            hseq_sc[pl.ds(row, B), :] = h_new           # next layer's input
            return h_new, c_new

        h_l, c_l = lax.fori_loop(0, Tc, step, (h_sc[layer], c_sc[layer]),
                                 unroll=min(8, Tc))
        h_sc[layer] = h_l
        c_sc[layer] = c_l

    # Single bulk flush of this chunk's output sequence.
    y_ref[...] = hseq_sc[...].astype(y_ref.dtype)

    @pl.when(c_idx == pl.num_programs(0) - 1)
    def _():
        hn_ref[...] = h_sc[...].astype(hn_ref.dtype)
        cn_ref[...] = c_sc[...].astype(cn_ref.dtype)


def _reorder_gate_cols(a):
    """Torch gate order (i, f, g, o) -> kernel order (i, f, o, g) on last axis."""
    i, f, g, o = jnp.split(a, 4, axis=-1)
    return jnp.concatenate([i, f, o, g], axis=-1)


def lstm_stack_pallas(x, w_ih0, w_ihr, w_hh, b, h0, c0, *,
                      hidden_size, max_chunk=64, mxu_dtype=jnp.float32):
    """Run the whole fused LSTM stack over the sequence.

    x      : (T, B, input_size)
    w_ih0  : (input_size, 4H)       layer-0 input weights (reordered)
    w_ihr  : (max(L-1,1), H, 4H)    input weights for layers > 0
    w_hh   : (L, H, 4H)
    b      : (L, 1, 4H)             f32
    h0, c0 : (L, B, H)
    returns y (T, B, H), h_n (L, B, H), c_n (L, B, H)
    """
    T, B, Din = x.shape
    H = hidden_size
    L = w_hh.shape[0]
    Lr = w_ihr.shape[0]
    dtype = x.dtype

    # Time-chunk size: no divisor search / no Tc=1 fallback; pad T instead.
    Tc = min(T, max_chunk)
    if (Tc * B) % 8 != 0:
        Tc = T                      # single chunk: block == full dims is legal
    n_chunks = pl.cdiv(T, Tc)
    Tp = n_chunks * Tc

    x_flat = x.reshape(T * B, Din)
    if Tp != T:
        x_flat = jnp.pad(x_flat, ((0, (Tp - T) * B), (0, 0)))

    kernel = functools.partial(
        _lstm_stack_kernel, hidden_size=H, num_layers=L, time_chunk=Tc,
        batch=B, seq_len=T, mxu_dtype=mxu_dtype)

    grid_spec = pltpu.PrefetchScalarGridSpec(
        num_scalar_prefetch=0,
        grid=(n_chunks,),
        in_specs=[
            pl.BlockSpec((Tc * B, Din), lambda c: (c, 0)),        # x chunk
            pl.BlockSpec((Din, 4 * H), lambda c: (0, 0)),         # W_ih layer0
            pl.BlockSpec((Lr, H, 4 * H), lambda c: (0, 0, 0)),    # W_ih layers>0
            pl.BlockSpec((L, H, 4 * H), lambda c: (0, 0, 0)),     # W_hh
            pl.BlockSpec((L, 1, 4 * H), lambda c: (0, 0, 0)),     # bias
            pl.BlockSpec((L, B, H), lambda c: (0, 0, 0)),         # h0
            pl.BlockSpec((L, B, H), lambda c: (0, 0, 0)),         # c0
        ],
        out_specs=[
            pl.BlockSpec((Tc * B, H), lambda c: (c, 0)),          # y chunk
            pl.BlockSpec((L, B, H), lambda c: (0, 0, 0)),         # h_n
            pl.BlockSpec((L, B, H), lambda c: (0, 0, 0)),         # c_n
        ],
        scratch_shapes=[
            pltpu.VMEM((Tc * B, H), jnp.float32),        # inter-layer sequence
            pltpu.VMEM((Tc * B, 4 * H), jnp.float32),    # hoisted gates_x
            pltpu.VMEM((L, B, H), jnp.float32),          # h carry
            pltpu.VMEM((L, B, H), jnp.float32),          # c carry
        ],
    )

    y_flat, h_n, c_n = pl.pallas_call(
        kernel,
        out_shape=(
            jax.ShapeDtypeStruct((Tp * B, H), dtype),
            jax.ShapeDtypeStruct((L, B, H), dtype),
            jax.ShapeDtypeStruct((L, B, H), dtype),
        ),
        grid_spec=grid_spec,
        compiler_params=pltpu.CompilerParams(
            # recurrence over time chunks -> must stay sequential
            dimension_semantics=("arbitrary",),
        ),
    )(x_flat, w_ih0, w_ihr, w_hh, b, h0, c0)

    y = y_flat.reshape(Tp, B, H)[:T]
    return y, h_n, c_n


class DecoderLSTMPallas:
    """JAX/Pallas port of binlin DecoderLSTM (unidirectional nn.LSTM)."""

    def __init__(self, input_size, hidden_size, num_layers, key,
                 batch_first=False, bidirectional=False,
                 mxu_dtype=jnp.float32):
        assert not bidirectional, "bidirectional not used by DecoderLSTM default"
        assert not batch_first, "module default is batch_first=False"
        self.input_size = input_size
        self.hidden_size = hidden_size
        self.num_layers = num_layers
        self.mxu_dtype = mxu_dtype
        H = hidden_size

        # Deterministic init, same distribution as torch nn.LSTM:
        # U(-1/sqrt(H), 1/sqrt(H)) for every weight/bias.
        k = float(hidden_size) ** -0.5
        self.params = []
        w_ih_list, w_hh_list, b_list = [], [], []
        for layer in range(num_layers):
            in_dim = input_size if layer == 0 else H
            key, k1, k2, k3, k4 = jax.random.split(key, 5)
            w_ih = jax.random.uniform(k1, (4 * H, in_dim), jnp.float32, -k, k)
            w_hh = jax.random.uniform(k2, (4 * H, H), jnp.float32, -k, k)
            b_ih = jax.random.uniform(k3, (4 * H,), jnp.float32, -k, k)
            b_hh = jax.random.uniform(k4, (4 * H,), jnp.float32, -k, k)
            self.params.append(dict(w_ih=w_ih, w_hh=w_hh, b_ih=b_ih, b_hh=b_hh))

            w_ih_list.append(_reorder_gate_cols(w_ih.T))           # (in_dim, 4H)
            w_hh_list.append(_reorder_gate_cols(w_hh.T))           # (H, 4H)
            b_list.append(_reorder_gate_cols(b_ih + b_hh)[None, :])  # (1, 4H)

        self.w_ih0 = w_ih_list[0].astype(mxu_dtype)                # (input_size, 4H)
        if num_layers > 1:
            self.w_ihr = jnp.stack(w_ih_list[1:], 0).astype(mxu_dtype)
        else:
            self.w_ihr = jnp.zeros((1, H, 4 * H), mxu_dtype)       # unused placeholder
        self.w_hh = jnp.stack(w_hh_list, 0).astype(mxu_dtype)      # (L, H, 4H)
        self.b = jnp.stack(b_list, 0)                              # (L, 1, 4H) f32

    def __call__(self, prev_y_batch, prev_h_batch, prev_c_batch):
        """prev_y: (T, B, input_size); prev_h/prev_c: (num_layers, B, H)."""
        return lstm_stack_pallas(
            prev_y_batch, self.w_ih0, self.w_ihr, self.w_hh, self.b,
            prev_h_batch, prev_c_batch,
            hidden_size=self.hidden_size, mxu_dtype=self.mxu_dtype)

    # Pure-JAX reference (lax.scan, torch gate order) for correctness checking.
    def reference(self, prev_y_batch, prev_h_batch, prev_c_batch):
        x = prev_y_batch
        H = self.hidden_size
        h_out, c_out = [], []
        for layer in range(self.num_layers):
            p = self.params[layer]

            def step(carry, x_t, p=p):
                h, c = carry
                gates = (x_t @ p["w_ih"].T + h @ p["w_hh"].T
                         + p["b_ih"] + p["b_hh"])
                i = jax.nn.sigmoid(gates[:, 0 * H:1 * H])
                f = jax.nn.sigmoid(gates[:, 1 * H:2 * H])
                g = jnp.tanh(gates[:, 2 * H:3 * H])
                o = jax.nn.sigmoid(gates[:, 3 * H:4 * H])
                c = f * c + i * g
                h = o * jnp.tanh(c)
                return (h, c), h

            (h_n, c_n), ys = jax.lax.scan(
                step, (prev_h_batch[layer], prev_c_batch[layer]), x)
            x = ys
            h_out.append(h_n)
            c_out.append(c_n)
        return x, jnp.stack(h_out, axis=0), jnp.stack(c_out, axis=0)


if __name__ == "__main__":
    # Small shapes consistent with the module's forward signature.
    T, B = 8, 4
    INPUT_SIZE, HIDDEN_SIZE, NUM_LAYERS = 16, 32, 2

    key = jax.random.PRNGKey(0)
    key, kx, kh, kc, kp = jax.random.split(key, 5)

    prev_y = jax.random.normal(kx, (T, B, INPUT_SIZE), jnp.float32)
    prev_h = jax.random.normal(kh, (NUM_LAYERS, B, HIDDEN_SIZE), jnp.float32)
    prev_c = jax.random.normal(kc, (NUM_LAYERS, B, HIDDEN_SIZE), jnp.float32)

    # f32 MXU operands by default (bit-tight vs reference at these tiny shapes);
    # pass mxu_dtype=jnp.bfloat16 for the v6e/v7x fast path.
    model = DecoderLSTMPallas(INPUT_SIZE, HIDDEN_SIZE, NUM_LAYERS, kp)

    y, h_n, c_n = model(prev_y, prev_h, prev_c)
    jax.block_until_ready((y, h_n, c_n))

    # Sanity check against the pure-JAX reference.
    y_ref, h_ref, c_ref = model.reference(prev_y, prev_h, prev_c)
    assert y.shape == (T, B, HIDDEN_SIZE)
    assert h_n.shape == (NUM_LAYERS, B, HIDDEN_SIZE)
    assert c_n.shape == (NUM_LAYERS, B, HIDDEN_SIZE)
    assert jnp.allclose(y, y_ref, atol=1e-4, rtol=1e-4)
    assert jnp.allclose(h_n, h_ref, atol=1e-4, rtol=1e-4)
    assert jnp.allclose(c_n, c_ref, atol=1e-4, rtol=1e-4)

    print("KERNEL_OK")
</pallas_src>

<mosaic_0001>
module attributes {stable_mosaic.version = 11 : i64} {
  func.func @_lstm_stack_kernel(%arg0: i32, %arg1: memref<32x16xf32, #tpu.memory_space<vmem>>, %arg2: memref<16x128xf32, #tpu.memory_space<vmem>>, %arg3: memref<1x32x128xf32, #tpu.memory_space<vmem>>, %arg4: memref<2x32x128xf32, #tpu.memory_space<vmem>>, %arg5: memref<2x1x128xf32, #tpu.memory_space<vmem>>, %arg6: memref<2x4x32xf32, #tpu.memory_space<vmem>>, %arg7: memref<2x4x32xf32, #tpu.memory_space<vmem>>, %arg8: memref<32x32xf32, #tpu.memory_space<vmem>>, %arg9: memref<2x4x32xf32, #tpu.memory_space<vmem>>, %arg10: memref<2x4x32xf32, #tpu.memory_space<vmem>>, %arg11: memref<32x32xf32, #tpu.memory_space<vmem>>, %arg12: memref<32x128xf32, #tpu.memory_space<vmem>>, %arg13: memref<2x4x32xf32, #tpu.memory_space<vmem>>, %arg14: memref<2x4x32xf32, #tpu.memory_space<vmem>>) attributes {dimension_semantics = [#tpu.dimension_semantics<arbitrary>], iteration_bounds = array<i64: 1>, scalar_prefetch = 0 : i64, scratch_operands = 4 : i64, tpu.core_type = #tpu.core_type<tc>, window_params = [{transform_indices = @transform_0, window_bounds = array<i64: 32, 16>}, {pipeline_mode = #tpu.pipeline_mode<synchronous>, transform_indices = @transform_1, window_bounds = array<i64: 16, 128>}, {pipeline_mode = #tpu.pipeline_mode<synchronous>, transform_indices = @transform_2, window_bounds = array<i64: 1, 32, 128>}, {pipeline_mode = #tpu.pipeline_mode<synchronous>, transform_indices = @transform_3, window_bounds = array<i64: 2, 32, 128>}, {pipeline_mode = #tpu.pipeline_mode<synchronous>, transform_indices = @transform_4, window_bounds = array<i64: 2, 1, 128>}, {pipeline_mode = #tpu.pipeline_mode<synchronous>, transform_indices = @transform_5, window_bounds = array<i64: 2, 4, 32>}, {pipeline_mode = #tpu.pipeline_mode<synchronous>, transform_indices = @transform_6, window_bounds = array<i64: 2, 4, 32>}, {transform_indices = @transform_7, window_bounds = array<i64: 32, 32>}, {pipeline_mode = #tpu.pipeline_mode<synchronous>, transform_indices = @transform_8, window_bounds = array<i64: 2, 4, 32>}, {pipeline_mode = #tpu.pipeline_mode<synchronous>, transform_indices = @transform_9, window_bounds = array<i64: 2, 4, 32>}]} {
    %c0_i32 = arith.constant 0 : i32
    %0 = arith.cmpi eq, %arg0, %c0_i32 : i32
    %1 = arith.extui %0 : i1 to i32
    %c0_i32_0 = arith.constant 0 : i32
    %2 = arith.cmpi ne, %1, %c0_i32_0 : i32
    scf.if %2 {
      %c0_145 = arith.constant 0 : index
      %c0_146 = arith.constant 0 : index
      %c0_147 = arith.constant 0 : index
      %433 = vector.load %arg6[%c0_145, %c0_146, %c0_147] : memref<2x4x32xf32, #tpu.memory_space<vmem>>, vector<2x4x32xf32>
      %c0_148 = arith.constant 0 : index
      %c0_149 = arith.constant 0 : index
      %c0_150 = arith.constant 0 : index
      %434 = vector.load %arg13[%c0_148, %c0_149, %c0_150] : memref<2x4x32xf32, #tpu.memory_space<vmem>>, vector<2x4x32xf32>
      tpu.vector_store %arg13[%c0_148, %c0_149, %c0_150], %433 {strides = array<i32>} : memref<2x4x32xf32, #tpu.memory_space<vmem>>, vector<2x4x32xf32>,
      %c0_151 = arith.constant 0 : index
      %c0_152 = arith.constant 0 : index
      %c0_153 = arith.constant 0 : index
      %435 = vector.load %arg7[%c0_151, %c0_152, %c0_153] : memref<2x4x32xf32, #tpu.memory_space<vmem>>, vector<2x4x32xf32>
      %c0_154 = arith.constant 0 : index
      %c0_155 = arith.constant 0 : index
      %c0_156 = arith.constant 0 : index
      %436 = vector.load %arg14[%c0_154, %c0_155, %c0_156] : memref<2x4x32xf32, #tpu.memory_space<vmem>>, vector<2x4x32xf32>
      tpu.vector_store %arg14[%c0_154, %c0_155, %c0_156], %435 {strides = array<i32>} : memref<2x4x32xf32, #tpu.memory_space<vmem>>, vector<2x4x32xf32>,
    } else {
    }
    %c0 = arith.constant 0 : index
    %c0_1 = arith.constant 0 : index
    %3 = vector.load %arg1[%c0, %c0_1] : memref<32x16xf32, #tpu.memory_space<vmem>>, vector<32x16xf32>
    %c0_2 = arith.constant 0 : index
    %c0_3 = arith.constant 0 : index
    %4 = vector.load %arg2[%c0_2, %c0_3] : memref<16x128xf32, #tpu.memory_space<vmem>>, vector<16x128xf32>
    %cst = arith.constant dense<0.000000e+00> : vector<32x128xf32>
    %5 = tpu.matmul %3, %4, %cst {dimension_numbers = #tpu.dot_dimension_numbers<[1], [0], [0], [1], [0, 0, 1, 1], [], []>} : vector<32x16xf32>, vector<16x128xf32>, vector<32x128xf32> -> vector<32x128xf32>
    %c0_4 = arith.constant 0 : index
    %c0_5 = arith.constant 0 : index
    %c0_6 = arith.constant 0 : index
    %6 = vector.load %arg5[%c0_4, %c0_5, %c0_6] : memref<2x1x128xf32, #tpu.memory_space<vmem>>, vector<1x1x128xf32>
    %7 = vector.shape_cast %6 : vector<1x1x128xf32> to vector<1x128xf32>
    %8 = vector.broadcast %7 : vector<1x128xf32> to vector<32x128xf32>
    %9 = arith.addf %5, %8 : vector<32x128xf32>
    %c0_7 = arith.constant 0 : index
    %c0_8 = arith.constant 0 : index
    %10 = vector.load %arg12[%c0_7, %c0_8] : memref<32x128xf32, #tpu.memory_space<vmem>>, vector<32x128xf32>
    tpu.vector_store %arg12[%c0_7, %c0_8], %9 {strides = array<i32>} : memref<32x128xf32, #tpu.memory_space<vmem>>, vector<32x128xf32>,
    %c0_9 = arith.constant 0 : index
    %c0_10 = arith.constant 0 : index
    %c0_11 = arith.constant 0 : index
    %11 = vector.load %arg4[%c0_9, %c0_10, %c0_11] : memref<2x32x128xf32, #tpu.memory_space<vmem>>, vector<1x32x128xf32>
    %12 = vector.shape_cast %11 : vector<1x32x128xf32> to vector<32x128xf32>
    %c0_12 = arith.constant 0 : index
    %c0_13 = arith.constant 0 : index
    %c0_14 = arith.constant 0 : index
    %13 = vector.load %arg13[%c0_12, %c0_13, %c0_14] : memref<2x4x32xf32, #tpu.memory_space<vmem>>, vector<1x4x32xf32>
    %14 = vector.shape_cast %13 : vector<1x4x32xf32> to vector<4x32xf32>
    %c0_15 = arith.constant 0 : index
    %c0_16 = arith.constant 0 : index
    %c0_17 = arith.constant 0 : index
    %15 = vector.load %arg14[%c0_15, %c0_16, %c0_17] : memref<2x4x32xf32, #tpu.memory_space<vmem>>, vector<1x4x32xf32>
    %16 = vector.shape_cast %15 : vector<1x4x32xf32> to vector<4x32xf32>
    %c0_i32_18 = arith.constant 0 : i32
    %c4_i32 = arith.constant 4 : i32
    %17 = arith.muli %c0_i32_18, %c4_i32 : i32
    %18 = tpu.assume_multiple %17, 4 : i32
    %19 = arith.index_cast %18 : i32 to index
    %c0_19 = arith.constant 0 : index
    %20 = vector.load %arg12[%19, %c0_19] : memref<32x128xf32, #tpu.memory_space<vmem>>, vector<4x128xf32>
    %cst_20 = arith.constant dense<0.000000e+00> : vector<4x128xf32>
    %21 = tpu.matmul %14, %12, %cst_20 {dimension_numbers = #tpu.dot_dimension_numbers<[1], [0], [0], [1], [0, 0, 1, 1], [], []>} : vector<4x32xf32>, vector<32x128xf32>, vector<4x128xf32> -> vector<4x128xf32>
    %22 = arith.addf %20, %21 : vector<4x128xf32>
    %23 = vector.extract_strided_slice %22 {offsets = [0, 0], sizes = [4, 96], strides = [1, 1]} : vector<4x128xf32> to vector<4x96xf32>
    %24 = arith.negf %23 : vector<4x96xf32>
    %25 = math.exp %24 : vector<4x96xf32>
    %cst_21 = arith.constant 1.000000e+00 : f32
    %26 = vector.broadcast %cst_21 : f32 to vector<4x96xf32>
    %27 = arith.addf %26, %25 : vector<4x96xf32>
    %28 = arith.divf %26, %27 : vector<4x96xf32>
    %29 = vector.extract_strided_slice %28 {offsets = [0, 0], sizes = [4, 32], strides = [1, 1]} : vector<4x96xf32> to vector<4x32xf32>
    %30 = vector.extract_strided_slice %28 {offsets = [0, 32], sizes = [4, 32], strides = [1, 1]} : vector<4x96xf32> to vector<4x32xf32>
    %31 = vector.extract_strided_slice %28 {offsets = [0, 64], sizes = [4, 32], strides = [1, 1]} : vector<4x96xf32> to vector<4x32xf32>
    %32 = vector.extract_strided_slice %22 {offsets = [0, 96], sizes = [4, 32], strides = [1, 1]} : vector<4x128xf32> to vector<4x32xf32>
    %33 = math.tanh %32 : vector<4x32xf32>
    %34 = arith.mulf %30, %16 : vector<4x32xf32>
    %35 = arith.mulf %29, %33 : vector<4x32xf32>
    %36 = arith.addf %34, %35 : vector<4x32xf32>
    %37 = math.tanh %36 : vector<4x32xf32>
    %38 = arith.mulf %31, %37 : vector<4x32xf32>
    %39 = arith.index_cast %18 : i32 to index
    %c0_22 = arith.constant 0 : index
    %40 = vector.load %arg11[%39, %c0_22] : memref<32x32xf32, #tpu.memory_space<vmem>>, vector<4x32xf32>
    tpu.vector_store %arg11[%39, %c0_22], %38 {strides = array<i32>} : memref<32x32xf32, #tpu.memory_space<vmem>>, vector<4x32xf32>,
    %c1_i32 = arith.constant 1 : i32
    %c4_i32_23 = arith.constant 4 : i32
    %41 = arith.muli %c1_i32, %c4_i32_23 : i32
    %42 = tpu.assume_multiple %41, 4 : i32
    %43 = arith.index_cast %42 : i32 to index
    %c0_24 = arith.constant 0 : index
    %44 = vector.load %arg12[%43, %c0_24] : memref<32x128xf32, #tpu.memory_space<vmem>>, vector<4x128xf32>
    %cst_25 = arith.constant dense<0.000000e+00> : vector<4x128xf32>
    %45 = tpu.matmul %38, %12, %cst_25 {dimension_numbers = #tpu.dot_dimension_numbers<[1], [0], [0], [1], [0, 0, 1, 1], [], []>} : vector<4x32xf32>, vector<32x128xf32>, vector<4x128xf32> -> vector<4x128xf32>
    %46 = arith.addf %44, %45 : vector<4x128xf32>
    %47 = vector.extract_strided_slice %46 {offsets = [0, 0], sizes = [4, 96], strides = [1, 1]} : vector<4x128xf32> to vector<4x96xf32>
    %48 = arith.negf %47 : vector<4x96xf32>
    %49 = math.exp %48 : vector<4x96xf32>
    %cst_26 = arith.constant 1.000000e+00 : f32
    %50 = vector.broadcast %cst_26 : f32 to vector<4x96xf32>
    %51 = arith.addf %50, %49 : vector<4x96xf32>
    %52 = arith.divf %50, %51 : vector<4x96xf32>
    %53 = vector.extract_strided_slice %52 {offsets = [0, 0], sizes = [4, 32], strides = [1, 1]} : vector<4x96xf32> to vector<4x32xf32>
    %54 = vector.extract_strided_slice %52 {offsets = [0, 32], sizes = [4, 32], strides = [1, 1]} : vector<4x96xf32> to vector<4x32xf32>
    %55 = vector.extract_strided_slice %52 {offsets = [0, 64], sizes = [4, 32], strides = [1, 1]} : vector<4x96xf32> to vector<4x32xf32>
    %56 = vector.extract_strided_slice %46 {offsets = [0, 96], sizes = [4, 32], strides = [1, 1]} : vector<4x128xf32> to vector<4x32xf32>
    %57 = math.tanh %56 : vector<4x32xf32>
    %58 = arith.mulf %54, %36 : vector<4x32xf32>
    %59 = arith.mulf %53, %57 : vector<4x32xf32>
    %60 = arith.addf %58, %59 : vector<4x32xf32>
    %61 = math.tanh %60 : vector<4x32xf32>
    %62 = arith.mulf %55, %61 : vector<4x32xf32>
    %63 = arith.index_cast %42 : i32 to index
    %c0_27 = arith.constant 0 : index
    %64 = vector.load %arg11[%63, %c0_27] : memref<32x32xf32, #tpu.memory_space<vmem>>, vector<4x32xf32>
    tpu.vector_store %arg11[%63, %c0_27], %62 {strides = array<i32>} : memref<32x32xf32, #tpu.memory_space<vmem>>, vector<4x32xf32>,
    %c2_i32 = arith.constant 2 : i32
    %c4_i32_28 = arith.constant 4 : i32
    %65 = arith.muli %c2_i32, %c4_i32_28 : i32
    %66 = tpu.assume_multiple %65, 4 : i32
    %67 = arith.index_cast %66 : i32 to index
    %c0_29 = arith.constant 0 : index
    %68 = vector.load %arg12[%67, %c0_29] : memref<32x128xf32, #tpu.memory_space<vmem>>, vector<4x128xf32>
    %cst_30 = arith.constant dense<0.000000e+00> : vector<4x128xf32>
    %69 = tpu.matmul %62, %12, %cst_30 {dimension_numbers = #tpu.dot_dimension_numbers<[1], [0], [0], [1], [0, 0, 1, 1], [], []>} : vector<4x32xf32>, vector<32x128xf32>, vector<4x128xf32> -> vector<4x128xf32>
    %70 = arith.addf %68, %69 : vector<4x128xf32>
    %71 = vector.extract_strided_slice %70 {offsets = [0, 0], sizes = [4, 96], strides = [1, 1]} : vector<4x128xf32> to vector<4x96xf32>
    %72 = arith.negf %71 : vector<4x96xf32>
    %73 = math.exp %72 : vector<4x96xf32>
    %cst_31 = arith.constant 1.000000e+00 : f32
    %74 = vector.broadcast %cst_31 : f32 to vector<4x96xf32>
    %75 = arith.addf %74, %73 : vector<4x96xf32>
    %76 = arith.divf %74, %75 : vector<4x96xf32>
    %77 = vector.extract_strided_slice %76 {offsets = [0, 0], sizes = [4, 32], strides = [1, 1]} : vector<4x96xf32> to vector<4x32xf32>
    %78 = vector.extract_strided_slice %76 {offsets = [0, 32], sizes = [4, 32], strides = [1, 1]} : vector<4x96xf32> to vector<4x32xf32>
    %79 = vector.extract_strided_slice %76 {offsets = [0, 64], sizes = [4, 32], strides = [1, 1]} : vector<4x96xf32> to vector<4x32xf32>
    %80 = vector.extract_strided_slice %70 {offsets = [0, 96], sizes = [4, 32], strides = [1, 1]} : vector<4x128xf32> to vector<4x32xf32>
    %81 = math.tanh %80 : vector<4x32xf32>
    %82 = arith.mulf %78, %60 : vector<4x32xf32>
    %83 = arith.mulf %77, %81 : vector<4x32xf32>
    %84 = arith.addf %82, %83 : vector<4x32xf32>
    %85 = math.tanh %84 : vector<4x32xf32>
    %86 = arith.mulf %79, %85 : vector<4x32xf32>
    %87 = arith.index_cast %66 : i32 to index
    %c0_32 = arith.constant 0 : index
    %88 = vector.load %arg11[%87, %c0_32] : memref<32x32xf32, #tpu.memory_space<vmem>>, vector<4x32xf32>
    tpu.vector_store %arg11[%87, %c0_32], %86 {strides = array<i32>} : memref<32x32xf32, #tpu.memory_space<vmem>>, vector<4x32xf32>,
    %c3_i32 = arith.constant 3 : i32
    %c4_i32_33 = arith.constant 4 : i32
    %89 = arith.muli %c3_i32, %c4_i32_33 : i32
    %90 = tpu.assume_multiple %89, 4 : i32
    %91 = arith.index_cast %90 : i32 to index
    %c0_34 = arith.constant 0 : index
    %92 = vector.load %arg12[%91, %c0_34] : memref<32x128xf32, #tpu.memory_space<vmem>>, vector<4x128xf32>
    %cst_35 = arith.constant dense<0.000000e+00> : vector<4x128xf32>
    %93 = tpu.matmul %86, %12, %cst_35 {dimension_numbers = #tpu.dot_dimension_numbers<[1], [0], [0], [1], [0, 0, 1, 1], [], []>} : vector<4x32xf32>, vector<32x128xf32>, vector<4x128xf32> -> vector<4x128xf32>
    %94 = arith.addf %92, %93 : vector<4x128xf32>
    %95 = vector.extract_strided_slice %94 {offsets = [0, 0], sizes = [4, 96], strides = [1, 1]} : vector<4x128xf32> to vector<4x96xf32>
    %96 = arith.negf %95 : vector<4x96xf32>
    %97 = math.exp %96 : vector<4x96xf32>
    %cst_36 = arith.constant 1.000000e+00 : f32
    %98 = vector.broadcast %cst_36 : f32 to vector<4x96xf32>
    %99 = arith.addf %98, %97 : vector<4x96xf32>
    %100 = arith.divf %98, %99 : vector<4x96xf32>
    %101 = vector.extract_strided_slice %100 {offsets = [0, 0], sizes = [4, 32], strides = [1, 1]} : vector<4x96xf32> to vector<4x32xf32>
    %102 = vector.extract_strided_slice %100 {offsets = [0, 32], sizes = [4, 32], strides = [1, 1]} : vector<4x96xf32> to vector<4x32xf32>
    %103 = vector.extract_strided_slice %100 {offsets = [0, 64], sizes = [4, 32], strides = [1, 1]} : vector<4x96xf32> to vector<4x32xf32>
    %104 = vector.extract_strided_slice %94 {offsets = [0, 96], sizes = [4, 32], strides = [1, 1]} : vector<4x128xf32> to vector<4x32xf32>
    %105 = math.tanh %104 : vector<4x32xf32>
    %106 = arith.mulf %102, %84 : vector<4x32xf32>
    %107 = arith.mulf %101, %105 : vector<4x32xf32>
    %108 = arith.addf %106, %107 : vector<4x32xf32>
    %109 = math.tanh %108 : vector<4x32xf32>
    %110 = arith.mulf %103, %109 : vector<4x32xf32>
    %111 = arith.index_cast %90 : i32 to index
    %c0_37 = arith.constant 0 : index
    %112 = vector.load %arg11[%111, %c0_37] : memref<32x32xf32, #tpu.memory_space<vmem>>, vector<4x32xf32>
    tpu.vector_store %arg11[%111, %c0_37], %110 {strides = array<i32>} : memref<32x32xf32, #tpu.memory_space<vmem>>, vector<4x32xf32>,
    %c4_i32_38 = arith.constant 4 : i32
    %c4_i32_39 = arith.constant 4 : i32
    %113 = arith.muli %c4_i32_38, %c4_i32_39 : i32
    %114 = tpu.assume_multiple %113, 4 : i32
    %115 = arith.index_cast %114 : i32 to index
    %c0_40 = arith.constant 0 : index
    %116 = vector.load %arg12[%115, %c0_40] : memref<32x128xf32, #tpu.memory_space<vmem>>, vector<4x128xf32>
    %cst_41 = arith.constant dense<0.000000e+00> : vector<4x128xf32>
    %117 = tpu.matmul %110, %12, %cst_41 {dimension_numbers = #tpu.dot_dimension_numbers<[1], [0], [0], [1], [0, 0, 1, 1], [], []>} : vector<4x32xf32>, vector<32x128xf32>, vector<4x128xf32> -> vector<4x128xf32>
    %118 = arith.addf %116, %117 : vector<4x128xf32>
    %119 = vector.extract_strided_slice %118 {offsets = [0, 0], sizes = [4, 96], strides = [1, 1]} : vector<4x128xf32> to vector<4x96xf32>
    %120 = arith.negf %119 : vector<4x96xf32>
    %121 = math.exp %120 : vector<4x96xf32>
    %cst_42 = arith.constant 1.000000e+00 : f32
    %122 = vector.broadcast %cst_42 : f32 to vector<4x96xf32>
    %123 = arith.addf %122, %121 : vector<4x96xf32>
    %124 = arith.divf %122, %123 : vector<4x96xf32>
    %125 = vector.extract_strided_slice %124 {offsets = [0, 0], sizes = [4, 32], strides = [1, 1]} : vector<4x96xf32> to vector<4x32xf32>
    %126 = vector.extract_strided_slice %124 {offsets = [0, 32], sizes = [4, 32], strides = [1, 1]} : vector<4x96xf32> to vector<4x32xf32>
    %127 = vector.extract_strided_slice %124 {offsets = [0, 64], sizes = [4, 32], strides = [1, 1]} : vector<4x96xf32> to vector<4x32xf32>
    %128 = vector.extract_strided_slice %118 {offsets = [0, 96], sizes = [4, 32], strides = [1, 1]} : vector<4x128xf32> to vector<4x32xf32>
    %129 = math.tanh %128 : vector<4x32xf32>
    %130 = arith.mulf %126, %108 : vector<4x32xf32>
    %131 = arith.mulf %125, %129 : vector<4x32xf32>
    %132 = arith.addf %130, %131 : vector<4x32xf32>
    %133 = math.tanh %132 : vector<4x32xf32>
    %134 = arith.mulf %127, %133 : vector<4x32xf32>
    %135 = arith.index_cast %114 : i32 to index
    %c0_43 = arith.constant 0 : index
    %136 = vector.load %arg11[%135, %c0_43] : memref<32x32xf32, #tpu.memory_space<vmem>>, vector<4x32xf32>
    tpu.vector_store %arg11[%135, %c0_43], %134 {strides = array<i32>} : memref<32x32xf32, #tpu.memory_space<vmem>>, vector<4x32xf32>,
    %c5_i32 = arith.constant 5 : i32
    %c4_i32_44 = arith.constant 4 : i32
    %137 = arith.muli %c5_i32, %c4_i32_44 : i32
    %138 = tpu.assume_multiple %137, 4 : i32
    %139 = arith.index_cast %138 : i32 to index
    %c0_45 = arith.constant 0 : index
    %140 = vector.load %arg12[%139, %c0_45] : memref<32x128xf32, #tpu.memory_space<vmem>>, vector<4x128xf32>
    %cst_46 = arith.constant dense<0.000000e+00> : vector<4x128xf32>
    %141 = tpu.matmul %134, %12, %cst_46 {dimension_numbers = #tpu.dot_dimension_numbers<[1], [0], [0], [1], [0, 0, 1, 1], [], []>} : vector<4x32xf32>, vector<32x128xf32>, vector<4x128xf32> -> vector<4x128xf32>
    %142 = arith.addf %140, %141 : vector<4x128xf32>
    %143 = vector.extract_strided_slice %142 {offsets = [0, 0], sizes = [4, 96], strides = [1, 1]} : vector<4x128xf32> to vector<4x96xf32>
    %144 = arith.negf %143 : vector<4x96xf32>
    %145 = math.exp %144 : vector<4x96xf32>
    %cst_47 = arith.constant 1.000000e+00 : f32
    %146 = vector.broadcast %cst_47 : f32 to vector<4x96xf32>
    %147 = arith.addf %146, %145 : vector<4x96xf32>
    %148 = arith.divf %146, %147 : vector<4x96xf32>
    %149 = vector.extract_strided_slice %148 {offsets = [0, 0], sizes = [4, 32], strides = [1, 1]} : vector<4x96xf32> to vector<4x32xf32>
    %150 = vector.extract_strided_slice %148 {offsets = [0, 32], sizes = [4, 32], strides = [1, 1]} : vector<4x96xf32> to vector<4x32xf32>
    %151 = vector.extract_strided_slice %148 {offsets = [0, 64], sizes = [4, 32], strides = [1, 1]} : vector<4x96xf32> to vector<4x32xf32>
    %152 = vector.extract_strided_slice %142 {offsets = [0, 96], sizes = [4, 32], strides = [1, 1]} : vector<4x128xf32> to vector<4x32xf32>
    %153 = math.tanh %152 : vector<4x32xf32>
    %154 = arith.mulf %150, %132 : vector<4x32xf32>
    %155 = arith.mulf %149, %153 : vector<4x32xf32>
    %156 = arith.addf %154, %155 : vector<4x32xf32>
    %157 = math.tanh %156 : vector<4x32xf32>
    %158 = arith.mulf %151, %157 : vector<4x32xf32>
    %159 = arith.index_cast %138 : i32 to index
    %c0_48 = arith.constant 0 : index
    %160 = vector.load %arg11[%159, %c0_48] : memref<32x32xf32, #tpu.memory_space<vmem>>, vector<4x32xf32>
    tpu.vector_store %arg11[%159, %c0_48], %158 {strides = array<i32>} : memref<32x32xf32, #tpu.memory_space<vmem>>, vector<4x32xf32>,
    %c6_i32 = arith.constant 6 : i32
    %c4_i32_49 = arith.constant 4 : i32
    %161 = arith.muli %c6_i32, %c4_i32_49 : i32
    %162 = tpu.assume_multiple %161, 4 : i32
    %163 = arith.index_cast %162 : i32 to index
    %c0_50 = arith.constant 0 : index
    %164 = vector.load %arg12[%163, %c0_50] : memref<32x128xf32, #tpu.memory_space<vmem>>, vector<4x128xf32>
    %cst_51 = arith.constant dense<0.000000e+00> : vector<4x128xf32>
    %165 = tpu.matmul %158, %12, %cst_51 {dimension_numbers = #tpu.dot_dimension_numbers<[1], [0], [0], [1], [0, 0, 1, 1], [], []>} : vector<4x32xf32>, vector<32x128xf32>, vector<4x128xf32> -> vector<4x128xf32>
    %166 = arith.addf %164, %165 : vector<4x128xf32>
    %167 = vector.extract_strided_slice %166 {offsets = [0, 0], sizes = [4, 96], strides = [1, 1]} : vector<4x128xf32> to vector<4x96xf32>
    %168 = arith.negf %167 : vector<4x96xf32>
    %169 = math.exp %168 : vector<4x96xf32>
    %cst_52 = arith.constant 1.000000e+00 : f32
    %170 = vector.broadcast %cst_52 : f32 to vector<4x96xf32>
    %171 = arith.addf %170, %169 : vector<4x96xf32>
    %172 = arith.divf %170, %171 : vector<4x96xf32>
    %173 = vector.extract_strided_slice %172 {offsets = [0, 0], sizes = [4, 32], strides = [1, 1]} : vector<4x96xf32> to vector<4x32xf32>
    %174 = vector.extract_strided_slice %172 {offsets = [0, 32], sizes = [4, 32], strides = [1, 1]} : vector<4x96xf32> to vector<4x32xf32>
    %175 = vector.extract_strided_slice %172 {offsets = [0, 64], sizes = [4, 32], strides = [1, 1]} : vector<4x96xf32> to vector<4x32xf32>
    %176 = vector.extract_strided_slice %166 {offsets = [0, 96], sizes = [4, 32], strides = [1, 1]} : vector<4x128xf32> to vector<4x32xf32>
    %177 = math.tanh %176 : vector<4x32xf32>
    %178 = arith.mulf %174, %156 : vector<4x32xf32>
    %179 = arith.mulf %173, %177 : vector<4x32xf32>
    %180 = arith.addf %178, %179 : vector<4x32xf32>
    %181 = math.tanh %180 : vector<4x32xf32>
    %182 = arith.mulf %175, %181 : vector<4x32xf32>
    %183 = arith.index_cast %162 : i32 to index
    %c0_53 = arith.constant 0 : index
    %184 = vector.load %arg11[%183, %c0_53] : memref<32x32xf32, #tpu.memory_space<vmem>>, vector<4x32xf32>
    tpu.vector_store %arg11[%183, %c0_53], %182 {strides = array<i32>} : memref<32x32xf32, #tpu.memory_space<vmem>>, vector<4x32xf32>,
    %c7_i32 = arith.constant 7 : i32
    %c4_i32_54 = arith.constant 4 : i32
    %185 = arith.muli %c7_i32, %c4_i32_54 : i32
    %186 = tpu.assume_multiple %185, 4 : i32
    %187 = arith.index_cast %186 : i32 to index
    %c0_55 = arith.constant 0 : index
    %188 = vector.load %arg12[%187, %c0_55] : memref<32x128xf32, #tpu.memory_space<vmem>>, vector<4x128xf32>
    %cst_56 = arith.constant dense<0.000000e+00> : vector<4x128xf32>
    %189 = tpu.matmul %182, %12, %cst_56 {dimension_numbers = #tpu.dot_dimension_numbers<[1], [0], [0], [1], [0, 0, 1, 1], [], []>} : vector<4x32xf32>, vector<32x128xf32>, vector<4x128xf32> -> vector<4x128xf32>
    %190 = arith.addf %188, %189 : vector<4x128xf32>
    %191 = vector.extract_strided_slice %190 {offsets = [0, 0], sizes = [4, 96], strides = [1, 1]} : vector<4x128xf32> to vector<4x96xf32>
    %192 = arith.negf %191 : vector<4x96xf32>
    %193 = math.exp %192 : vector<4x96xf32>
    %cst_57 = arith.constant 1.000000e+00 : f32
    %194 = vector.broadcast %cst_57 : f32 to vector<4x96xf32>
    %195 = arith.addf %194, %193 : vector<4x96xf32>
    %196 = arith.divf %194, %195 : vector<4x96xf32>
    %197 = vector.extract_strided_slice %196 {offsets = [0, 0], sizes = [4, 32], strides = [1, 1]} : vector<4x96xf32> to vector<4x32xf32>
    %198 = vector.extract_strided_slice %196 {offsets = [0, 32], sizes = [4, 32], strides = [1, 1]} : vector<4x96xf32> to vector<4x32xf32>
    %199 = vector.extract_strided_slice %196 {offsets = [0, 64], sizes = [4, 32], strides = [1, 1]} : vector<4x96xf32> to vector<4x32xf32>
    %200 = vector.extract_strided_slice %190 {offsets = [0, 96], sizes = [4, 32], strides = [1, 1]} : vector<4x128xf32> to vector<4x32xf32>
    %201 = math.tanh %200 : vector<4x32xf32>
    %202 = arith.mulf %198, %180 : vector<4x32xf32>
    %203 = arith.mulf %197, %201 : vector<4x32xf32>
    %204 = arith.addf %202, %203 : vector<4x32xf32>
    %205 = math.tanh %204 : vector<4x32xf32>
    %206 = arith.mulf %199, %205 : vector<4x32xf32>
    %207 = arith.index_cast %186 : i32 to index
    %c0_58 = arith.constant 0 : index
    %208 = vector.load %arg11[%207, %c0_58] : memref<32x32xf32, #tpu.memory_space<vmem>>, vector<4x32xf32>
    tpu.vector_store %arg11[%207, %c0_58], %206 {strides = array<i32>} : memref<32x32xf32, #tpu.memory_space<vmem>>, vector<4x32xf32>,
    %c8_i32 = arith.constant 8 : i32
    %c0_59 = arith.constant 0 : index
    %c0_60 = arith.constant 0 : index
    %c0_61 = arith.constant 0 : index
    %209 = vector.load %arg13[%c0_59, %c0_60, %c0_61] : memref<2x4x32xf32, #tpu.memory_space<vmem>>, vector<1x4x32xf32>
    %210 = vector.shape_cast %209 : vector<1x4x32xf32> to vector<4x32xf32>
    %211 = vector.shape_cast %206 : vector<4x32xf32> to vector<1x4x32xf32>
    tpu.vector_store %arg13[%c0_59, %c0_60, %c0_61], %211 {strides = array<i32>} : memref<2x4x32xf32, #tpu.memory_space<vmem>>, vector<1x4x32xf32>,
    %c0_62 = arith.constant 0 : index
    %c0_63 = arith.constant 0 : index
    %c0_64 = arith.constant 0 : index
    %212 = vector.load %arg14[%c0_62, %c0_63, %c0_64] : memref<2x4x32xf32, #tpu.memory_space<vmem>>, vector<1x4x32xf32>
    %213 = vector.shape_cast %212 : vector<1x4x32xf32> to vector<4x32xf32>
    %214 = vector.shape_cast %204 : vector<4x32xf32> to vector<1x4x32xf32>
    tpu.vector_store %arg14[%c0_62, %c0_63, %c0_64], %214 {strides = array<i32>} : memref<2x4x32xf32, #tpu.memory_space<vmem>>, vector<1x4x32xf32>,
    %c0_65 = arith.constant 0 : index
    %c0_66 = arith.constant 0 : index
    %215 = vector.load %arg11[%c0_65, %c0_66] : memref<32x32xf32, #tpu.memory_space<vmem>>, vector<32x32xf32>
    %c0_67 = arith.constant 0 : index
    %c0_68 = arith.constant 0 : index
    %c0_69 = arith.constant 0 : index
    %216 = vector.load %arg3[%c0_67, %c0_68, %c0_69] : memref<1x32x128xf32, #tpu.memory_space<vmem>>, vector<1x32x128xf32>
    %217 = vector.shape_cast %216 : vector<1x32x128xf32> to vector<32x128xf32>
    %cst_70 = arith.constant dense<0.000000e+00> : vector<32x128xf32>
    %218 = tpu.matmul %215, %217, %cst_70 {dimension_numbers = #tpu.dot_dimension_numbers<[1], [0], [0], [1], [0, 0, 1, 1], [], []>} : vector<32x32xf32>, vector<32x128xf32>, vector<32x128xf32> -> vector<32x128xf32>
    %c1 = arith.constant 1 : index
    %c0_71 = arith.constant 0 : index
    %c0_72 = arith.constant 0 : index
    %219 = vector.load %arg5[%c1, %c0_71, %c0_72] : memref<2x1x128xf32, #tpu.memory_space<vmem>>, vector<1x1x128xf32>
    %220 = vector.shape_cast %219 : vector<1x1x128xf32> to vector<1x128xf32>
    %221 = vector.broadcast %220 : vector<1x128xf32> to vector<32x128xf32>
    %222 = arith.addf %218, %221 : vector<32x128xf32>
    %c0_73 = arith.constant 0 : index
    %c0_74 = arith.constant 0 : index
    %223 = vector.load %arg12[%c0_73, %c0_74] : memref<32x128xf32, #tpu.memory_space<vmem>>, vector<32x128xf32>
    tpu.vector_store %arg12[%c0_73, %c0_74], %222 {strides = array<i32>} : memref<32x128xf32, #tpu.memory_space<vmem>>, vector<32x128xf32>,
    %c1_75 = arith.constant 1 : index
    %c0_76 = arith.constant 0 : index
    %c0_77 = arith.constant 0 : index
    %224 = vector.load %arg4[%c1_75, %c0_76, %c0_77] : memref<2x32x128xf32, #tpu.memory_space<vmem>>, vector<1x32x128xf32>
    %225 = vector.shape_cast %224 : vector<1x32x128xf32> to vector<32x128xf32>
    %c1_78 = arith.constant 1 : index
    %c0_79 = arith.constant 0 : index
    %c0_80 = arith.constant 0 : index
    %226 = vector.load %arg13[%c1_78, %c0_79, %c0_80] : memref<2x4x32xf32, #tpu.memory_space<vmem>>, vector<1x4x32xf32>
    %227 = vector.shape_cast %226 : vector<1x4x32xf32> to vector<4x32xf32>
    %c1_81 = arith.constant 1 : index
    %c0_82 = arith.constant 0 : index
    %c0_83 = arith.constant 0 : index
    %228 = vector.load %arg14[%c1_81, %c0_82, %c0_83] : memref<2x4x32xf32, #tpu.memory_space<vmem>>, vector<1x4x32xf32>
    %229 = vector.shape_cast %228 : vector<1x4x32xf32> to vector<4x32xf32>
    %c0_i32_84 = arith.constant 0 : i32
    %c4_i32_85 = arith.constant 4 : i32
    %230 = arith.muli %c0_i32_84, %c4_i32_85 : i32
    %231 = tpu.assume_multiple %230, 4 : i32
    %232 = arith.index_cast %231 : i32 to index
    %c0_86 = arith.constant 0 : index
    %233 = vector.load %arg12[%232, %c0_86] : memref<32x128xf32, #tpu.memory_space<vmem>>, vector<4x128xf32>
    %cst_87 = arith.constant dense<0.000000e+00> : vector<4x128xf32>
    %234 = tpu.matmul %227, %225, %cst_87 {dimension_numbers = #tpu.dot_dimension_numbers<[1], [0], [0], [1], [0, 0, 1, 1], [], []>} : vector<4x32xf32>, vector<32x128xf32>, vector<4x128xf32> -> vector<4x128xf32>
    %235 = arith.addf %233, %234 : vector<4x128xf32>
    %236 = vector.extract_strided_slice %235 {offsets = [0, 0], sizes = [4, 96], strides = [1, 1]} : vector<4x128xf32> to vector<4x96xf32>
    %237 = arith.negf %236 : vector<4x96xf32>
    %238 = math.exp %237 : vector<4x96xf32>
    %cst_88 = arith.constant 1.000000e+00 : f32
    %239 = vector.broadcast %cst_88 : f32 to vector<4x96xf32>
    %240 = arith.addf %239, %238 : vector<4x96xf32>
    %241 = arith.divf %239, %240 : vector<4x96xf32>
    %242 = vector.extract_strided_slice %241 {offsets = [0, 0], sizes = [4, 32], strides = [1, 1]} : vector<4x96xf32> to vector<4x32xf32>
    %243 = vector.extract_strided_slice %241 {offsets = [0, 32], sizes = [4, 32], strides = [1, 1]} : vector<4x96xf32> to vector<4x32xf32>
    %244 = vector.extract_strided_slice %241 {offsets = [0, 64], sizes = [4, 32], strides = [1, 1]} : vector<4x96xf32> to vector<4x32xf32>
    %245 = vector.extract_strided_slice %235 {offsets = [0, 96], sizes = [4, 32], strides = [1, 1]} : vector<4x128xf32> to vector<4x32xf32>
    %246 = math.tanh %245 : vector<4x32xf32>
    %247 = arith.mulf %243, %229 : vector<4x32xf32>
    %248 = arith.mulf %242, %246 : vector<4x32xf32>
    %249 = arith.addf %247, %248 : vector<4x32xf32>
    %250 = math.tanh %249 : vector<4x32xf32>
    %251 = arith.mulf %244, %250 : vector<4x32xf32>
    %252 = arith.index_cast %231 : i32 to index
    %c0_89 = arith.constant 0 : index
    %253 = vector.load %arg11[%252, %c0_89] : memref<32x32xf32, #tpu.memory_space<vmem>>, vector<4x32xf32>
    tpu.vector_store %arg11[%252, %c0_89], %251 {strides = array<i32>} : memref<32x32xf32, #tpu.memory_space<vmem>>, vector<4x32xf32>,
    %c1_i32_90 = arith.constant 1 : i32
    %c4_i32_91 = arith.constant 4 : i32
    %254 = arith.muli %c1_i32_90, %c4_i32_91 : i32
    %255 = tpu.assume_multiple %254, 4 : i32
    %256 = arith.index_cast %255 : i32 to index
    %c0_92 = arith.constant 0 : index
    %257 = vector.load %arg12[%256, %c0_92] : memref<32x128xf32, #tpu.memory_space<vmem>>, vector<4x128xf32>
    %cst_93 = arith.constant dense<0.000000e+00> : vector<4x128xf32>
    %258 = tpu.matmul %251, %225, %cst_93 {dimension_numbers = #tpu.dot_dimension_numbers<[1], [0], [0], [1], [0, 0, 1, 1], [], []>} : vector<4x32xf32>, vector<32x128xf32>, vector<4x128xf32> -> vector<4x128xf32>
    %259 = arith.addf %257, %258 : vector<4x128xf32>
    %260 = vector.extract_strided_slice %259 {offsets = [0, 0], sizes = [4, 96], strides = [1, 1]} : vector<4x128xf32> to vector<4x96xf32>
    %261 = arith.negf %260 : vector<4x96xf32>
    %262 = math.exp %261 : vector<4x96xf32>
    %cst_94 = arith.constant 1.000000e+00 : f32
    %263 = vector.broadcast %cst_94 : f32 to vector<4x96xf32>
    %264 = arith.addf %263, %262 : vector<4x96xf32>
    %265 = arith.divf %263, %264 : vector<4x96xf32>
    %266 = vector.extract_strided_slice %265 {offsets = [0, 0], sizes = [4, 32], strides = [1, 1]} : vector<4x96xf32> to vector<4x32xf32>
    %267 = vector.extract_strided_slice %265 {offsets = [0, 32], sizes = [4, 32], strides = [1, 1]} : vector<4x96xf32> to vector<4x32xf32>
    %268 = vector.extract_strided_slice %265 {offsets = [0, 64], sizes = [4, 32], strides = [1, 1]} : vector<4x96xf32> to vector<4x32xf32>
    %269 = vector.extract_strided_slice %259 {offsets = [0, 96], sizes = [4, 32], strides = [1, 1]} : vector<4x128xf32> to vector<4x32xf32>
    %270 = math.tanh %269 : vector<4x32xf32>
    %271 = arith.mulf %267, %249 : vector<4x32xf32>
    %272 = arith.mulf %266, %270 : vector<4x32xf32>
    %273 = arith.addf %271, %272 : vector<4x32xf32>
    %274 = math.tanh %273 : vector<4x32xf32>
    %275 = arith.mulf %268, %274 : vector<4x32xf32>
    %276 = arith.index_cast %255 : i32 to index
    %c0_95 = arith.constant 0 : index
    %277 = vector.load %arg11[%276, %c0_95] : memref<32x32xf32, #tpu.memory_space<vmem>>, vector<4x32xf32>
    tpu.vector_store %arg11[%276, %c0_95], %275 {strides = array<i32>} : memref<32x32xf32, #tpu.memory_space<vmem>>, vector<4x32xf32>,
    %c2_i32_96 = arith.constant 2 : i32
    %c4_i32_97 = arith.constant 4 : i32
    %278 = arith.muli %c2_i32_96, %c4_i32_97 : i32
    %279 = tpu.assume_multiple %278, 4 : i32
    %280 = arith.index_cast %279 : i32 to index
    %c0_98 = arith.constant 0 : index
    %281 = vector.load %arg12[%280, %c0_98] : memref<32x128xf32, #tpu.memory_space<vmem>>, vector<4x128xf32>
    %cst_99 = arith.constant dense<0.000000e+00> : vector<4x128xf32>
    %282 = tpu.matmul %275, %225, %cst_99 {dimension_numbers = #tpu.dot_dimension_numbers<[1], [0], [0], [1], [0, 0, 1, 1], [], []>} : vector<4x32xf32>, vector<32x128xf32>, vector<4x128xf32> -> vector<4x128xf32>
    %283 = arith.addf %281, %282 : vector<4x128xf32>
    %284 = vector.extract_strided_slice %283 {offsets = [0, 0], sizes = [4, 96], strides = [1, 1]} : vector<4x128xf32> to vector<4x96xf32>
    %285 = arith.negf %284 : vector<4x96xf32>
    %286 = math.exp %285 : vector<4x96xf32>
    %cst_100 = arith.constant 1.000000e+00 : f32
    %287 = vector.broadcast %cst_100 : f32 to vector<4x96xf32>
    %288 = arith.addf %287, %286 : vector<4x96xf32>
    %289 = arith.divf %287, %288 : vector<4x96xf32>
    %290 = vector.extract_strided_slice %289 {offsets = [0, 0], sizes = [4, 32], strides = [1, 1]} : vector<4x96xf32> to vector<4x32xf32>
    %291 = vector.extract_strided_slice %289 {offsets = [0, 32], sizes = [4, 32], strides = [1, 1]} : vector<4x96xf32> to vector<4x32xf32>
    %292 = vector.extract_strided_slice %289 {offsets = [0, 64], sizes = [4, 32], strides = [1, 1]} : vector<4x96xf32> to vector<4x32xf32>
    %293 = vector.extract_strided_slice %283 {offsets = [0, 96], sizes = [4, 32], strides = [1, 1]} : vector<4x128xf32> to vector<4x32xf32>
    %294 = math.tanh %293 : vector<4x32xf32>
    %295 = arith.mulf %291, %273 : vector<4x32xf32>
    %296 = arith.mulf %290, %294 : vector<4x32xf32>
    %297 = arith.addf %295, %296 : vector<4x32xf32>
    %298 = math.tanh %297 : vector<4x32xf32>
    %299 = arith.mulf %292, %298 : vector<4x32xf32>
    %300 = arith.index_cast %279 : i32 to index
    %c0_101 = arith.constant 0 : index
    %301 = vector.load %arg11[%300, %c0_101] : memref<32x32xf32, #tpu.memory_space<vmem>>, vector<4x32xf32>
    tpu.vector_store %arg11[%300, %c0_101], %299 {strides = array<i32>} : memref<32x32xf32, #tpu.memory_space<vmem>>, vector<4x32xf32>,
    %c3_i32_102 = arith.constant 3 : i32
    %c4_i32_103 = arith.constant 4 : i32
    %302 = arith.muli %c3_i32_102, %c4_i32_103 : i32
    %303 = tpu.assume_multiple %302, 4 : i32
    %304 = arith.index_cast %303 : i32 to index
    %c0_104 = arith.constant 0 : index
    %305 = vector.load %arg12[%304, %c0_104] : memref<32x128xf32, #tpu.memory_space<vmem>>, vector<4x128xf32>
    %cst_105 = arith.constant dense<0.000000e+00> : vector<4x128xf32>
    %306 = tpu.matmul %299, %225, %cst_105 {dimension_numbers = #tpu.dot_dimension_numbers<[1], [0], [0], [1], [0, 0, 1, 1], [], []>} : vector<4x32xf32>, vector<32x128xf32>, vector<4x128xf32> -> vector<4x128xf32>
    %307 = arith.addf %305, %306 : vector<4x128xf32>
    %308 = vector.extract_strided_slice %307 {offsets = [0, 0], sizes = [4, 96], strides = [1, 1]} : vector<4x128xf32> to vector<4x96xf32>
    %309 = arith.negf %308 : vector<4x96xf32>
    %310 = math.exp %309 : vector<4x96xf32>
    %cst_106 = arith.constant 1.000000e+00 : f32
    %311 = vector.broadcast %cst_106 : f32 to vector<4x96xf32>
    %312 = arith.addf %311, %310 : vector<4x96xf32>
    %313 = arith.divf %311, %312 : vector<4x96xf32>
    %314 = vector.extract_strided_slice %313 {offsets = [0, 0], sizes = [4, 32], strides = [1, 1]} : vector<4x96xf32> to vector<4x32xf32>
    %315 = vector.extract_strided_slice %313 {offsets = [0, 32], sizes = [4, 32], strides = [1, 1]} : vector<4x96xf32> to vector<4x32xf32>
    %316 = vector.extract_strided_slice %313 {offsets = [0, 64], sizes = [4, 32], strides = [1, 1]} : vector<4x96xf32> to vector<4x32xf32>
    %317 = vector.extract_strided_slice %307 {offsets = [0, 96], sizes = [4, 32], strides = [1, 1]} : vector<4x128xf32> to vector<4x32xf32>
    %318 = math.tanh %317 : vector<4x32xf32>
    %319 = arith.mulf %315, %297 : vector<4x32xf32>
    %320 = arith.mulf %314, %318 : vector<4x32xf32>
    %321 = arith.addf %319, %320 : vector<4x32xf32>
    %322 = math.tanh %321 : vector<4x32xf32>
    %323 = arith.mulf %316, %322 : vector<4x32xf32>
    %324 = arith.index_cast %303 : i32 to index
    %c0_107 = arith.constant 0 : index
    %325 = vector.load %arg11[%324, %c0_107] : memref<32x32xf32, #tpu.memory_space<vmem>>, vector<4x32xf32>
    tpu.vector_store %arg11[%324, %c0_107], %323 {strides = array<i32>} : memref<32x32xf32, #tpu.memory_space<vmem>>, vector<4x32xf32>,
    %c4_i32_108 = arith.constant 4 : i32
    %c4_i32_109 = arith.constant 4 : i32
    %326 = arith.muli %c4_i32_108, %c4_i32_109 : i32
    %327 = tpu.assume_multiple %326, 4 : i32
    %328 = arith.index_cast %327 : i32 to index
    %c0_110 = arith.constant 0 : index
    %329 = vector.load %arg12[%328, %c0_110] : memref<32x128xf32, #tpu.memory_space<vmem>>, vector<4x128xf32>
    %cst_111 = arith.constant dense<0.000000e+00> : vector<4x128xf32>
    %330 = tpu.matmul %323, %225, %cst_111 {dimension_numbers = #tpu.dot_dimension_numbers<[1], [0], [0], [1], [0, 0, 1, 1], [], []>} : vector<4x32xf32>, vector<32x128xf32>, vector<4x128xf32> -> vector<4x128xf32>
    %331 = arith.addf %329, %330 : vector<4x128xf32>
    %332 = vector.extract_strided_slice %331 {offsets = [0, 0], sizes = [4, 96], strides = [1, 1]} : vector<4x128xf32> to vector<4x96xf32>
    %333 = arith.negf %332 : vector<4x96xf32>
    %334 = math.exp %333 : vector<4x96xf32>
    %cst_112 = arith.constant 1.000000e+00 : f32
    %335 = vector.broadcast %cst_112 : f32 to vector<4x96xf32>
    %336 = arith.addf %335, %334 : vector<4x96xf32>
    %337 = arith.divf %335, %336 : vector<4x96xf32>
    %338 = vector.extract_strided_slice %337 {offsets = [0, 0], sizes = [4, 32], strides = [1, 1]} : vector<4x96xf32> to vector<4x32xf32>
    %339 = vector.extract_strided_slice %337 {offsets = [0, 32], sizes = [4, 32], strides = [1, 1]} : vector<4x96xf32> to vector<4x32xf32>
    %340 = vector.extract_strided_slice %337 {offsets = [0, 64], sizes = [4, 32], strides = [1, 1]} : vector<4x96xf32> to vector<4x32xf32>
    %341 = vector.extract_strided_slice %331 {offsets = [0, 96], sizes = [4, 32], strides = [1, 1]} : vector<4x128xf32> to vector<4x32xf32>
    %342 = math.tanh %341 : vector<4x32xf32>
    %343 = arith.mulf %339, %321 : vector<4x32xf32>
    %344 = arith.mulf %338, %342 : vector<4x32xf32>
    %345 = arith.addf %343, %344 : vector<4x32xf32>
    %346 = math.tanh %345 : vector<4x32xf32>
    %347 = arith.mulf %340, %346 : vector<4x32xf32>
    %348 = arith.index_cast %327 : i32 to index
    %c0_113 = arith.constant 0 : index
    %349 = vector.load %arg11[%348, %c0_113] : memref<32x32xf32, #tpu.memory_space<vmem>>, vector<4x32xf32>
    tpu.vector_store %arg11[%348, %c0_113], %347 {strides = array<i32>} : memref<32x32xf32, #tpu.memory_space<vmem>>, vector<4x32xf32>,
    %c5_i32_114 = arith.constant 5 : i32
    %c4_i32_115 = arith.constant 4 : i32
    %350 = arith.muli %c5_i32_114, %c4_i32_115 : i32
    %351 = tpu.assume_multiple %350, 4 : i32
    %352 = arith.index_cast %351 : i32 to index
    %c0_116 = arith.constant 0 : index
    %353 = vector.load %arg12[%352, %c0_116] : memref<32x128xf32, #tpu.memory_space<vmem>>, vector<4x128xf32>
    %cst_117 = arith.constant dense<0.000000e+00> : vector<4x128xf32>
    %354 = tpu.matmul %347, %225, %cst_117 {dimension_numbers = #tpu.dot_dimension_numbers<[1], [0], [0], [1], [0, 0, 1, 1], [], []>} : vector<4x32xf32>, vector<32x128xf32>, vector<4x128xf32> -> vector<4x128xf32>
    %355 = arith.addf %353, %354 : vector<4x128xf32>
    %356 = vector.extract_strided_slice %355 {offsets = [0, 0], sizes = [4, 96], strides = [1, 1]} : vector<4x128xf32> to vector<4x96xf32>
    %357 = arith.negf %356 : vector<4x96xf32>
    %358 = math.exp %357 : vector<4x96xf32>
    %cst_118 = arith.constant 1.000000e+00 : f32
    %359 = vector.broadcast %cst_118 : f32 to vector<4x96xf32>
    %360 = arith.addf %359, %358 : vector<4x96xf32>
    %361 = arith.divf %359, %360 : vector<4x96xf32>
    %362 = vector.extract_strided_slice %361 {offsets = [0, 0], sizes = [4, 32], strides = [1, 1]} : vector<4x96xf32> to vector<4x32xf32>
    %363 = vector.extract_strided_slice %361 {offsets = [0, 32], sizes = [4, 32], strides = [1, 1]} : vector<4x96xf32> to vector<4x32xf32>
    %364 = vector.extract_strided_slice %361 {offsets = [0, 64], sizes = [4, 32], strides = [1, 1]} : vector<4x96xf32> to vector<4x32xf32>
    %365 = vector.extract_strided_slice %355 {offsets = [0, 96], sizes = [4, 32], strides = [1, 1]} : vector<4x128xf32> to vector<4x32xf32>
    %366 = math.tanh %365 : vector<4x32xf32>
    %367 = arith.mulf %363, %345 : vector<4x32xf32>
    %368 = arith.mulf %362, %366 : vector<4x32xf32>
    %369 = arith.addf %367, %368 : vector<4x32xf32>
    %370 = math.tanh %369 : vector<4x32xf32>
    %371 = arith.mulf %364, %370 : vector<4x32xf32>
    %372 = arith.index_cast %351 : i32 to index
    %c0_119 = arith.constant 0 : index
    %373 = vector.load %arg11[%372, %c0_119] : memref<32x32xf32, #tpu.memory_space<vmem>>, vector<4x32xf32>
    tpu.vector_store %arg11[%372, %c0_119], %371 {strides = array<i32>} : memref<32x32xf32, #tpu.memory_space<vmem>>, vector<4x32xf32>,
    %c6_i32_120 = arith.constant 6 : i32
    %c4_i32_121 = arith.constant 4 : i32
    %374 = arith.muli %c6_i32_120, %c4_i32_121 : i32
    %375 = tpu.assume_multiple %374, 4 : i32
    %376 = arith.index_cast %375 : i32 to index
    %c0_122 = arith.constant 0 : index
    %377 = vector.load %arg12[%376, %c0_122] : memref<32x128xf32, #tpu.memory_space<vmem>>, vector<4x128xf32>
    %cst_123 = arith.constant dense<0.000000e+00> : vector<4x128xf32>
    %378 = tpu.matmul %371, %225, %cst_123 {dimension_numbers = #tpu.dot_dimension_numbers<[1], [0], [0], [1], [0, 0, 1, 1], [], []>} : vector<4x32xf32>, vector<32x128xf32>, vector<4x128xf32> -> vector<4x128xf32>
    %379 = arith.addf %377, %378 : vector<4x128xf32>
    %380 = vector.extract_strided_slice %379 {offsets = [0, 0], sizes = [4, 96], strides = [1, 1]} : vector<4x128xf32> to vector<4x96xf32>
    %381 = arith.negf %380 : vector<4x96xf32>
    %382 = math.exp %381 : vector<4x96xf32>
    %cst_124 = arith.constant 1.000000e+00 : f32
    %383 = vector.broadcast %cst_124 : f32 to vector<4x96xf32>
    %384 = arith.addf %383, %382 : vector<4x96xf32>
    %385 = arith.divf %383, %384 : vector<4x96xf32>
    %386 = vector.extract_strided_slice %385 {offsets = [0, 0], sizes = [4, 32], strides = [1, 1]} : vector<4x96xf32> to vector<4x32xf32>
    %387 = vector.extract_strided_slice %385 {offsets = [0, 32], sizes = [4, 32], strides = [1, 1]} : vector<4x96xf32> to vector<4x32xf32>
    %388 = vector.extract_strided_slice %385 {offsets = [0, 64], sizes = [4, 32], strides = [1, 1]} : vector<4x96xf32> to vector<4x32xf32>
    %389 = vector.extract_strided_slice %379 {offsets = [0, 96], sizes = [4, 32], strides = [1, 1]} : vector<4x128xf32> to vector<4x32xf32>
    %390 = math.tanh %389 : vector<4x32xf32>
    %391 = arith.mulf %387, %369 : vector<4x32xf32>
    %392 = arith.mulf %386, %390 : vector<4x32xf32>
    %393 = arith.addf %391, %392 : vector<4x32xf32>
    %394 = math.tanh %393 : vector<4x32xf32>
    %395 = arith.mulf %388, %394 : vector<4x32xf32>
    %396 = arith.index_cast %375 : i32 to index
    %c0_125 = arith.constant 0 : index
    %397 = vector.load %arg11[%396, %c0_125] : memref<32x32xf32, #tpu.memory_space<vmem>>, vector<4x32xf32>
    tpu.vector_store %arg11[%396, %c0_125], %395 {strides = array<i32>} : memref<32x32xf32, #tpu.memory_space<vmem>>, vector<4x32xf32>,
    %c7_i32_126 = arith.constant 7 : i32
    %c4_i32_127 = arith.constant 4 : i32
    %398 = arith.muli %c7_i32_126, %c4_i32_127 : i32
    %399 = tpu.assume_multiple %398, 4 : i32
    %400 = arith.index_cast %399 : i32 to index
    %c0_128 = arith.constant 0 : index
    %401 = vector.load %arg12[%400, %c0_128] : memref<32x128xf32, #tpu.memory_space<vmem>>, vector<4x128xf32>
    %cst_129 = arith.constant dense<0.000000e+00> : vector<4x128xf32>
    %402 = tpu.matmul %395, %225, %cst_129 {dimension_numbers = #tpu.dot_dimension_numbers<[1], [0], [0], [1], [0, 0, 1, 1], [], []>} : vector<4x32xf32>, vector<32x128xf32>, vector<4x128xf32> -> vector<4x128xf32>
    %403 = arith.addf %401, %402 : vector<4x128xf32>
    %404 = vector.extract_strided_slice %403 {offsets = [0, 0], sizes = [4, 96], strides = [1, 1]} : vector<4x128xf32> to vector<4x96xf32>
    %405 = arith.negf %404 : vector<4x96xf32>
    %406 = math.exp %405 : vector<4x96xf32>
    %cst_130 = arith.constant 1.000000e+00 : f32
    %407 = vector.broadcast %cst_130 : f32 to vector<4x96xf32>
    %408 = arith.addf %407, %406 : vector<4x96xf32>
    %409 = arith.divf %407, %408 : vector<4x96xf32>
    %410 = vector.extract_strided_slice %409 {offsets = [0, 0], sizes = [4, 32], strides = [1, 1]} : vector<4x96xf32> to vector<4x32xf32>
    %411 = vector.extract_strided_slice %409 {offsets = [0, 32], sizes = [4, 32], strides = [1, 1]} : vector<4x96xf32> to vector<4x32xf32>
    %412 = vector.extract_strided_slice %409 {offsets = [0, 64], sizes = [4, 32], strides = [1, 1]} : vector<4x96xf32> to vector<4x32xf32>
    %413 = vector.extract_strided_slice %403 {offsets = [0, 96], sizes = [4, 32], strides = [1, 1]} : vector<4x128xf32> to vector<4x32xf32>
    %414 = math.tanh %413 : vector<4x32xf32>
    %415 = arith.mulf %411, %393 : vector<4x32xf32>
    %416 = arith.mulf %410, %414 : vector<4x32xf32>
    %417 = arith.addf %415, %416 : vector<4x32xf32>
    %418 = math.tanh %417 : vector<4x32xf32>
    %419 = arith.mulf %412, %418 : vector<4x32xf32>
    %420 = arith.index_cast %399 : i32 to index
    %c0_131 = arith.constant 0 : index
    %421 = vector.load %arg11[%420, %c0_131] : memref<32x32xf32, #tpu.memory_space<vmem>>, vector<4x32xf32>
    tpu.vector_store %arg11[%420, %c0_131], %419 {strides = array<i32>} : memref<32x32xf32, #tpu.memory_space<vmem>>, vector<4x32xf32>,
    %c8_i32_132 = arith.constant 8 : i32
    %c1_133 = arith.constant 1 : index
    %c0_134 = arith.constant 0 : index
    %c0_135 = arith.constant 0 : index
    %422 = vector.load %arg13[%c1_133, %c0_134, %c0_135] : memref<2x4x32xf32, #tpu.memory_space<vmem>>, vector<1x4x32xf32>
    %423 = vector.shape_cast %422 : vector<1x4x32xf32> to vector<4x32xf32>
    %424 = vector.shape_cast %419 : vector<4x32xf32> to vector<1x4x32xf32>
    tpu.vector_store %arg13[%c1_133, %c0_134, %c0_135], %424 {strides = array<i32>} : memref<2x4x32xf32, #tpu.memory_space<vmem>>, vector<1x4x32xf32>,
    %c1_136 = arith.constant 1 : index
    %c0_137 = arith.constant 0 : index
    %c0_138 = arith.constant 0 : index
    %425 = vector.load %arg14[%c1_136, %c0_137, %c0_138] : memref<2x4x32xf32, #tpu.memory_space<vmem>>, vector<1x4x32xf32>
    %426 = vector.shape_cast %425 : vector<1x4x32xf32> to vector<4x32xf32>
    %427 = vector.shape_cast %417 : vector<4x32xf32> to vector<1x4x32xf32>
    tpu.vector_store %arg14[%c1_136, %c0_137, %c0_138], %427 {strides = array<i32>} : memref<2x4x32xf32, #tpu.memory_space<vmem>>, vector<1x4x32xf32>,
    %c0_139 = arith.constant 0 : index
    %c0_140 = arith.constant 0 : index
    %428 = vector.load %arg11[%c0_139, %c0_140] : memref<32x32xf32, #tpu.memory_space<vmem>>, vector<32x32xf32>
    %c0_141 = arith.constant 0 : index
    %c0_142 = arith.constant 0 : index
    %429 = vector.load %arg8[%c0_141, %c0_142] : memref<32x32xf32, #tpu.memory_space<vmem>>, vector<32x32xf32>
    tpu.vector_store %arg8[%c0_141, %c0_142], %428 {strides = array<i32>} : memref<32x32xf32, #tpu.memory_space<vmem>>, vector<32x32xf32>,
    %c0_i32_143 = arith.constant 0 : i32
    %430 = arith.cmpi eq, %arg0, %c0_i32_143 : i32
    %431 = arith.extui %430 : i1 to i32
    %c0_i32_144 = arith.constant 0 : i32
    %432 = arith.cmpi ne, %431, %c0_i32_144 : i32
    scf.if %432 {
      %c0_145 = arith.constant 0 : index
      %c0_146 = arith.constant 0 : index
      %c0_147 = arith.constant 0 : index
      %433 = vector.load %arg13[%c0_145, %c0_146, %c0_147] : memref<2x4x32xf32, #tpu.memory_space<vmem>>, vector<2x4x32xf32>
      %c0_148 = arith.constant 0 : index
      %c0_149 = arith.constant 0 : index
      %c0_150 = arith.constant 0 : index
      %434 = vector.load %arg9[%c0_148, %c0_149, %c0_150] : memref<2x4x32xf32, #tpu.memory_space<vmem>>, vector<2x4x32xf32>
      tpu.vector_store %arg9[%c0_148, %c0_149, %c0_150], %433 {strides = array<i32>} : memref<2x4x32xf32, #tpu.memory_space<vmem>>, vector<2x4x32xf32>,
      %c0_151 = arith.constant 0 : index
      %c0_152 = arith.constant 0 : index
      %c0_153 = arith.constant 0 : index
      %435 = vector.load %arg14[%c0_151, %c0_152, %c0_153] : memref<2x4x32xf32, #tpu.memory_space<vmem>>, vector<2x4x32xf32>
      %c0_154 = arith.constant 0 : index
      %c0_155 = arith.constant 0 : index
      %c0_156 = arith.constant 0 : index
      %436 = vector.load %arg10[%c0_154, %c0_155, %c0_156] : memref<2x4x32xf32, #tpu.memory_space<vmem>>, vector<2x4x32xf32>
      tpu.vector_store %arg10[%c0_154, %c0_155, %c0_156], %435 {strides = array<i32>} : memref<2x4x32xf32, #tpu.memory_space<vmem>>, vector<2x4x32xf32>,
    } else {
    }
    return
  }
  func.func @transform_0(%arg0: i32) -> (i32, i32) {
    %c0_i32 = arith.constant 0 : i32
    %c0_i32_0 = arith.constant 0 : i32
    return %arg0, %c0_i32 : i32, i32
  }
  func.func @transform_1(%arg0: i32) -> (i32, i32) {
    %c0_i32 = arith.constant 0 : i32
    %c0_i32_0 = arith.constant 0 : i32
    %c0_i32_1 = arith.constant 0 : i32
    return %c0_i32, %c0_i32_0 : i32, i32
  }
  func.func @transform_2(%arg0: i32) -> (i32, i32, i32) {
    %c0_i32 = arith.constant 0 : i32
    %c0_i32_0 = arith.constant 0 : i32
    %c0_i32_1 = arith.constant 0 : i32
    %c0_i32_2 = arith.constant 0 : i32
    return %c0_i32, %c0_i32_0, %c0_i32_1 : i32, i32, i32
  }
  func.func @transform_3(%arg0: i32) -> (i32, i32, i32) {
    %c0_i32 = arith.constant 0 : i32
    %c0_i32_0 = arith.constant 0 : i32
    %c0_i32_1 = arith.constant 0 : i32
    %c0_i32_2 = arith.constant 0 : i32
    return %c0_i32, %c0_i32_0, %c0_i32_1 : i32, i32, i32
  }
  func.func @transform_4(%arg0: i32) -> (i32, i32, i32) {
    %c0_i32 = arith.constant 0 : i32
    %c0_i32_0 = arith.constant 0 : i32
    %c0_i32_1 = arith.constant 0 : i32
    %c0_i32_2 = arith.constant 0 : i32
    return %c0_i32, %c0_i32_0, %c0_i32_1 : i32, i32, i32
  }
  func.func @transform_5(%arg0: i32) -> (i32, i32, i32) {
    %c0_i32 = arith.constant 0 : i32
    %c0_i32_0 = arith.constant 0 : i32
    %c0_i32_1 = arith.constant 0 : i32
    %c0_i32_2 = arith.constant 0 : i32
    return %c0_i32, %c0_i32_0, %c0_i32_1 : i32, i32, i32
  }
  func.func @transform_6(%arg0: i32) -> (i32, i32, i32) {
    %c0_i32 = arith.constant 0 : i32
    %c0_i32_0 = arith.constant 0 : i32
    %c0_i32_1 = arith.constant 0 : i32
    %c0_i32_2 = arith.constant 0 : i32
    return %c0_i32, %c0_i32_0, %c0_i32_1 : i32, i32, i32
  }
  func.func @transform_7(%arg0: i32) -> (i32, i32) {
    %c0_i32 = arith.constant 0 : i32
    %c0_i32_0 = arith.constant 0 : i32
    return %arg0, %c0_i32 : i32, i32
  }
  func.func @transform_8(%arg0: i32) -> (i32, i32, i32) {
    %c0_i32 = arith.constant 0 : i32
    %c0_i32_0 = arith.constant 0 : i32
    %c0_i32_1 = arith.constant 0 : i32
    %c0_i32_2 = arith.constant 0 : i32
    return %c0_i32, %c0_i32_0, %c0_i32_1 : i32, i32, i32
  }
  func.func @transform_9(%arg0: i32) -> (i32, i32, i32) {
    %c0_i32 = arith.constant 0 : i32
    %c0_i32_0 = arith.constant 0 : i32
    %c0_i32_1 = arith.constant 0 : i32
    %c0_i32_2 = arith.constant 0 : i32
    return %c0_i32, %c0_i32_0, %c0_i32_1 : i32, i32, i32
  }
}

</mosaic_0001>

<llo_original>
// kernel: tpu_custom_call.1
$region0: #{tpu_custom_call.1}
  #allocation0 [shape = 'u32[]', space=smem, size = 0x4, offset = 0x4, fixed_abs, tag = 'smem constant byte address 0x4 - core index']
  #allocation1 [shape = 'u32[72,128]{1,0:T(1,128)}', space=vmem, size = 0x9000, scoped, tag = 'internal scratch']
  #allocation2 [shape = 'f32[32,32]{1,0:T(8,128)}', space=vmem, size = 0x4000, scoped, tag = 'scratch operand']
  #allocation3 [shape = 'f32[32,128]{1,0:T(8,128)}', space=vmem, size = 0x4000, scoped, tag = 'scratch operand']
  #allocation4 [shape = 'f32[2,4,32]{2,1,0:T(4,128)}', space=vmem, size = 0x1000, scoped, tag = 'scratch operand']
  #allocation5 [shape = 'f32[2,4,32]{2,1,0:T(4,128)}', space=vmem, size = 0x1000, scoped, tag = 'scratch operand']
  %s0 = inlined_call_operand.vmem [shape: f32[32,16], index: 0, kind: input, shape index: {}]
  %s1 = inlined_call_operand.vmem [shape: f32[16,128], index: 1, kind: input, shape index: {}]
  %s2 = inlined_call_operand.vmem [shape: f32[1,32,128], index: 2, kind: input, shape index: {}]
  %s3 = inlined_call_operand.hbm [shape: f32[2,32,128], index: 3, kind: input, shape index: {}]
  %s4 = inlined_call_operand.vmem [shape: f32[2,1,128], index: 4, kind: input, shape index: {}]
  %s5 = inlined_call_operand.hbm [shape: f32[2,4,32], index: 5, kind: input, shape index: {}]
  %s6 = inlined_call_operand.hbm [shape: f32[2,4,32], index: 6, kind: input, shape index: {}]
  %s7 = inlined_call_operand.hbm [shape: f32[32,32], index: 7, kind: output, shape index: {0}]
  %s8 = inlined_call_operand.hbm [shape: f32[2,4,32], index: 8, kind: output, shape index: {1}]
  %s9 = inlined_call_operand.hbm [shape: f32[2,4,32], index: 9, kind: output, shape index: {2}]
  %10 = xla_tuple %s7, %s8, %s9
  %s11 = sld [smem:[#allocation0]]
  $region74: #{tpu_custom_call.1} parent=0
    _
  %s13 = ssub.s32 1, %s11
  %s14 = scalar_select 0, %s13, %s11
  $region1: #{tpu_custom_call.1} parent=0
    #allocation6 [shape = 'u8[32768]{0}', space=vmem, size = 0x8000, scoped, tag = 'input window, operand 3, single buffered']
    #allocation7 [shape = 's32[1]{0}', space=sflag, size = 0x4, scoped, tag = 'scoped memory for tpu_custom_call.1']
    #allocation8 [shape = 's32[1]{0}', space=sflag, size = 0x4, scoped, tag = 'scoped memory for tpu_custom_call.1']
    #allocation9 [shape = 'u8[4096]{0}', space=vmem, size = 0x1000, scoped, tag = 'input window, operand 5, single buffered']
    #allocation10 [shape = 's32[1]{0}', space=sflag, size = 0x4, scoped, tag = 'scoped memory for tpu_custom_call.1']
    #allocation11 [shape = 'u8[4096]{0}', space=vmem, size = 0x1000, scoped, tag = 'input window, operand 6, single buffered']
    #allocation12 [shape = 'u8[16384]{0}', space=vmem, size = 0x4000, scoped, tag = 'output window, operand 0, single buffered']
    #allocation13 [shape = 'u8[4096]{0}', space=vmem, size = 0x1000, scoped, tag = 'output window, operand 1, single buffered']
    #allocation14 [shape = 's32[1]{0}', space=sflag, size = 0x4, scoped, tag = 'scoped memory for tpu_custom_call.1']
    #allocation15 [shape = 'u8[4096]{0}', space=vmem, size = 0x1000, scoped, tag = 'output window, operand 2, single buffered']
    %15 = vsyncpa [#allocation7], 0
    %16 = vsyncpa [#allocation10], 0
    %17 = vsyncpa [#allocation8], 0
    %18 = vsyncpa [#allocation14], 0
    // Predicated region
    $region2: #{tpu_custom_call.1} parent=1 // pred_check
      _
    $region3: #{tpu_custom_call.1} parent=1 // pred_check_branch
      %20 = sbr.rel (0) target = $region5
    $region4: #{tpu_custom_call.1} parent=1 // pred_region
      _
    $region5: #{tpu_custom_call.1} parent=1 // pred_fallthru
      _
    // Predicated region
    $region6: #{tpu_custom_call.1} parent=1 // pred_check
      _
    $region7: #{tpu_custom_call.1} parent=1 // pred_check_branch
      %22 = sbr.rel (0) target = $region9
    $region8: #{tpu_custom_call.1} parent=1 // pred_region
      _
    $region9: #{tpu_custom_call.1} parent=1 // pred_fallthru
      _
    // Predicated region
    $region10: #{tpu_custom_call.1} parent=1 // pred_check
      _
    $region11: #{tpu_custom_call.1} parent=1 // pred_check_branch
      %24 = sbr.rel (0) target = $region13
    $region12: #{tpu_custom_call.1} parent=1 // pred_region
      _
    $region13: #{tpu_custom_call.1} parent=1 // pred_fallthru
      _
    // Predicated region
    $region14: #{tpu_custom_call.1} parent=1 // pred_check
      _
    $region15: #{tpu_custom_call.1} parent=1 // pred_check_branch
      %26 = sbr.rel (0) target = $region17
    $region16: #{tpu_custom_call.1} parent=1 // pred_region
      %28 = vsyncadd [#allocation7], 0
      %s29 = sshll.u32 %s3, 4
      %s30 = int_to_ptr.hbm [resolvable:$true] %s29
      %s31 = sshll.u32 [#allocation6], 4
      %s32 = int_to_ptr.vmem [resolvable:$true] %s31
      %37 = dma.hbm_to_vmem [thread:$0]  %s30, 1024, %s32, [#allocation7], 128, 128, 8
    $region17: #{tpu_custom_call.1} parent=1 // pred_fallthru
      _
    // Predicated region
    $region18: #{tpu_custom_call.1} parent=1 // pred_check
      _
    $region19: #{tpu_custom_call.1} parent=1 // pred_check_branch
      %39 = sbr.rel (0) target = $region21
    $region20: #{tpu_custom_call.1} parent=1 // pred_region
      _
    $region21: #{tpu_custom_call.1} parent=1 // pred_fallthru
      _
    // Predicated region
    $region22: #{tpu_custom_call.1} parent=1 // pred_check
      _
    $region23: #{tpu_custom_call.1} parent=1 // pred_check_branch
      %41 = sbr.rel (0) target = $region25
    $region24: #{tpu_custom_call.1} parent=1 // pred_region
      %43 = vsyncadd [#allocation10], 0
      %s44 = sshll.u32 %s5, 4
      %s45 = int_to_ptr.hbm [resolvable:$true] %s44
      %s46 = sshll.u32 [#allocation9], 4
      %s47 = int_to_ptr.vmem [resolvable:$true] %s46
      %52 = dma.hbm_to_vmem [thread:$0]  %s45, 128, %s47, [#allocation10], 64, 64, 4
    $region25: #{tpu_custom_call.1} parent=1 // pred_fallthru
      _
    // Predicated region
    $region26: #{tpu_custom_call.1} parent=1 // pred_check
      _
    $region27: #{tpu_custom_call.1} parent=1 // pred_check_branch
      %54 = sbr.rel (0) target = $region29
    $region28: #{tpu_custom_call.1} parent=1 // pred_region
      %56 = vsyncadd [#allocation10], 0
      %s57 = sshll.u32 %s6, 4
      %s58 = int_to_ptr.hbm [resolvable:$true] %s57
      %s59 = sshll.u32 [#allocation11], 4
      %s60 = int_to_ptr.vmem [resolvable:$true] %s59
      %65 = dma.hbm_to_vmem [thread:$0]  %s58, 128, %s60, [#allocation10], 64, 64, 4
    $region29: #{tpu_custom_call.1} parent=1 // pred_fallthru
      _
    // Predicated region
    $region30: #{tpu_custom_call.1} parent=1 // pred_check
      _
    $region31: #{tpu_custom_call.1} parent=1 // pred_check_branch
      %67 = sbr.rel (0) target = $region33
    $region32: #{tpu_custom_call.1} parent=1 // pred_region
      %69 = dma.done [#allocation7], 1024
    $region33: #{tpu_custom_call.1} parent=1 // pred_fallthru
      _
    // Predicated region
    $region34: #{tpu_custom_call.1} parent=1 // pred_check
      _
    $region35: #{tpu_custom_call.1} parent=1 // pred_check_branch
      %71 = sbr.rel (0) target = $region37
    $region36: #{tpu_custom_call.1} parent=1 // pred_region
      %73 = dma.done [#allocation10], 128
    $region37: #{tpu_custom_call.1} parent=1 // pred_fallthru
      _
    // Predicated region
    $region38: #{tpu_custom_call.1} parent=1 // pred_check
      _
    $region39: #{tpu_custom_call.1} parent=1 // pred_check_branch
      %75 = sbr.rel (0) target = $region41
    $region40: #{tpu_custom_call.1} parent=1 // pred_region
      %77 = dma.done [#allocation10], 128
    $region41: #{tpu_custom_call.1} parent=1 // pred_fallthru
      _
    %p78 = scmp.eq.s32.totalorder 0, 0
    // Predicated region
    $region42: #{tpu_custom_call.1} parent=1 // pred_check
      %p79 = pneg %p78
    $region43: #{tpu_custom_call.1} parent=1 // pred_check_branch
      %81 = sbr.rel (%p79) target = $region45
    $region44: #{tpu_custom_call.1} parent=1 // pred_region
      %v82 = vld [vmem:[#allocation9] sm:$0xf]
      %v83 = vld [vmem:[#allocation9 + $0x4] sm:$0xf]
      %vm84 = vcmask 257024
      %85 = vst.msk [vmem:[#allocation4] sm:$0xf] %vm84, %v82
      %86 = vst.msk [vmem:[#allocation4 + $0x4] sm:$0xf] %vm84, %v83
      %v87 = vld [vmem:[#allocation11] sm:$0xf]
      %v88 = vld [vmem:[#allocation11 + $0x4] sm:$0xf]
      %89 = vst.msk [vmem:[#allocation5] sm:$0xf] %vm84, %v87
      %90 = vst.msk [vmem:[#allocation5 + $0x4] sm:$0xf] %vm84, %v88
    $region45: #{tpu_custom_call.1} parent=1 // pred_fallthru
      _
    %v91 = vld [vmem:[%s0] sm:$0xff]
    %v92 = vld [vmem:[%s0 + $0x8] sm:$0xff]
    %v93 = vld [vmem:[%s0 + $0x10] sm:$0xff]
    %v94 = vld [vmem:[%s0 + $0x18] sm:$0xff]
    %v95 = vld [vmem:[%s1] sm:$0xff]
    %v96 = vld [vmem:[%s1 + $0x8] sm:$0xff]
    %v97 = vld [vmem:[%s4] sm:$0x1]
    %v99 = vperm.slane %v97, 0
    %vm101 = vcmask 130048
    %v103 = vsel %vm101, %v91, 0
    %v106 = vsel %vm101, %v92, 0
    %v109 = vsel %vm101, %v93, 0
    %v112 = vsel %vm101, %v94, 0
    %114 = vmatpush.msra.mxu0 0.0
    %115 = vmatpush.msra.mxu0 0.0
    %116 = vmatpush.msra.mxu0 0.0
    %117 = vmatpush.msra.mxu0 0.0
    %118 = vmatpush.msra.mxu0 0.0
    %119 = vmatpush.msra.mxu0 0.0
    %120 = vmatpush.msra.mxu0 0.0
    %121 = vmatpush.msra.mxu0 0.0
    %122 = vmatpush.msra.mxu0 0.0
    %123 = vmatpush.msra.mxu0 0.0
    %124 = vmatpush.msra.mxu0 0.0
    %125 = vmatpush.msra.mxu0 0.0
    %126 = vmatpush.msra.mxu0 0.0
    %127 = vmatpush.msra.mxu0 0.0
    %128 = vmatpush.msra.mxu0 %v96
    %129 = vmatpush.msra.mxu0 %v95
    %130 = vmatmul.f32.gmra.mxu0 %v103
    %v131 = vpop.f32.mrf.mxu0
    %v132 = vadd.f32 %v99, %v131
    %133 = vmatmul.f32.gmra.mxu0 %v106
    %v134 = vpop.f32.mrf.mxu0
    %v135 = vadd.f32 %v99, %v134
    %136 = vmatmul.f32.gmra.mxu0 %v109
    %v137 = vpop.f32.mrf.mxu0
    %v138 = vadd.f32 %v99, %v137
    %139 = vmatmul.f32.gmra.mxu0 %v112
    %v140 = vpop.f32.mrf.mxu0
    %v141 = vadd.f32 %v99, %v140
    %142 = vdwg.mxu0
    %143 = vst [vmem:[#allocation3] sm:$0xff] %v132
    %144 = vst [vmem:[#allocation3 + $0x8] sm:$0xff] %v135
    %145 = vst [vmem:[#allocation3 + $0x10] sm:$0xff] %v138
    %146 = vst [vmem:[#allocation3 + $0x18] sm:$0xff] %v141
    %v147 = vld [vmem:[#allocation6] sm:$0xff]
    %v148 = vld [vmem:[#allocation6 + $0x8] sm:$0xff]
    %v149 = vld [vmem:[#allocation6 + $0x10] sm:$0xff]
    %v150 = vld [vmem:[#allocation6 + $0x18] sm:$0xff]
    %v151 = vld [vmem:[#allocation4] sm:$0xf]
    %v152 = vld [vmem:[#allocation5] sm:$0xf]
    %v153 = vld [vmem:[#allocation3] sm:$0xf]
    %vm154 = vcmask 261120
    %v156 = vsel %vm154, %v151, 0
    %158 = vmatpush.msra.mxu0 0.0
    %159 = vmatpush.msra.mxu0 0.0
    %160 = vmatpush.msra.mxu0 0.0
    %161 = vmatpush.msra.mxu0 0.0
    %162 = vmatpush.msra.mxu0 0.0
    %163 = vmatpush.msra.mxu0 0.0
    %164 = vmatpush.msra.mxu0 0.0
    %165 = vmatpush.msra.mxu0 0.0
    %166 = vmatpush.msra.mxu0 0.0
    %167 = vmatpush.msra.mxu0 0.0
    %168 = vmatpush.msra.mxu0 0.0
    %169 = vmatpush.msra.mxu0 0.0
    %170 = vmatpush.msra.mxu0 %v150
    %171 = vmatpush.msra.mxu0 %v149
    %172 = vmatpush.msra.mxu0 %v148
    %173 = vmatpush.msra.mxu0 %v147
    %174 = vmatmul.f32.gmra.mxu0 %v156
    %v175 = vpop.f32.mrf.mxu0
    %v176 = vadd.f32 0.0, %v175
    %177 = vdwg.mxu0
    %v178 = vadd.f32 %v153, %v176
    %v179 = vxor.u32 %v178, 2147483648
    %v180 = vmul.f32 %v179, 1.442695
    %v181 = vpow.pop %v180
    %v182 = vadd.f32 %v181, 1.0
    %v183 = vrcp.pop %v182
    %v184 = vmul.f32 %v182, %v183
    %v185 = vsub.f32 1.0, %v184
    %v186 = vmul.f32 %v183, %v185
    %v187 = vadd.f32 %v183, %v186
    %vm188 = vweird.f32 %v182
    %vm189 = vweird.f32 %v183
    %vm190 = vmor %vm188, %vm189
    %v191 = vsel %vm190, %v183, %v187
    %v192 = vand.u32 2147483647, %v182
    %vm193 = vcmp.eq.f32.partialorder %v192, 8.507059e+37
    %v194 = vand.u32 %v182, 2147483648
    %v195 = vor.u32 1.1754944e-38, %v194
    %v196 = vsel %vm193, %v195, %v191
    %v197 = vmul.f32 1.0, %v196
    %v198 = vtanh.pop %v178
    %200 = vrot.lane.b32.xlu0 %v152, 32
    %v201 = vpop.permute.xlu0 %200
    %v203 = vmul.f32 %v197, %v201
    %205 = vrot.lane.b32.xlu0 %v198, 32
    %v206 = vpop.permute.xlu0 %205
    %v208 = vmul.f32 %v197, %v206
    %210 = vrot.lane.b32.xlu0 %v208, 32
    %v211 = vpop.permute.xlu0 %210
    %v213 = vadd.f32 %v203, %v211
    %v214 = vtanh.pop %v213
    %216 = vrot.lane.b32.xlu0 %v214, 32
    %v217 = vpop.permute.xlu0 %216
    %v219 = vmul.f32 %v197, %v217
    %221 = vrot.lane.b32.xlu0 %v219, 64
    %v222 = vpop.permute.xlu0 %221
    %vm224 = vcmask 257024
    %225 = vst.msk [vmem:[#allocation2] sm:$0xf] %vm224, %v222
    %s226 = scalar_lea.vmem [#allocation3], 4
    %v227 = vld [vmem:[%s226] sm:$0xf]
    %v228 = vsel %vm154, %v222, 0
    %230 = vmatpush.msra.mxu0 0.0
    %231 = vmatpush.msra.mxu0 0.0
    %232 = vmatpush.msra.mxu0 0.0
    %233 = vmatpush.msra.mxu0 0.0
    %234 = vmatpush.msra.mxu0 0.0
    %235 = vmatpush.msra.mxu0 0.0
    %236 = vmatpush.msra.mxu0 0.0
    %237 = vmatpush.msra.mxu0 0.0
    %238 = vmatpush.msra.mxu0 0.0
    %239 = vmatpush.msra.mxu0 0.0
    %240 = vmatpush.msra.mxu0 0.0
    %241 = vmatpush.msra.mxu0 0.0
    %242 = vmatpush.msra.mxu0 %v150
    %243 = vmatpush.msra.mxu0 %v149
    %244 = vmatpush.msra.mxu0 %v148
    %245 = vmatpush.msra.mxu0 %v147
    %246 = vmatmul.f32.gmra.mxu0 %v228
    %v247 = vpop.f32.mrf.mxu0
    %v248 = vadd.f32 0.0, %v247
    %249 = vdwg.mxu0
    %v250 = vadd.f32 %v227, %v248
    %v251 = vxor.u32 %v250, 2147483648
    %v252 = vmul.f32 %v251, 1.442695
    %v253 = vpow.pop %v252
    %v254 = vadd.f32 %v253, 1.0
    %v255 = vrcp.pop %v254
    %v256 = vmul.f32 %v254, %v255
    %v257 = vsub.f32 1.0, %v256
    %v258 = vmul.f32 %v255, %v257
    %v259 = vadd.f32 %v255, %v258
    %vm260 = vweird.f32 %v254
    %vm261 = vweird.f32 %v255
    %vm262 = vmor %vm260, %vm261
    %v263 = vsel %vm262, %v255, %v259
    %v264 = vand.u32 2147483647, %v254
    %vm265 = vcmp.eq.f32.partialorder %v264, 8.507059e+37
    %v266 = vand.u32 %v254, 2147483648
    %v267 = vor.u32 1.1754944e-38, %v266
    %v268 = vsel %vm265, %v267, %v263
    %v269 = vmul.f32 1.0, %v268
    %v270 = vtanh.pop %v250
    %v271 = vmul.f32 %v269, %v213
    %273 = vrot.lane.b32.xlu0 %v270, 32
    %v274 = vpop.permute.xlu0 %273
    %v276 = vmul.f32 %v269, %v274
    %278 = vrot.lane.b32.xlu0 %v276, 32
    %v279 = vpop.permute.xlu0 %278
    %v281 = vadd.f32 %v271, %v279
    %v282 = vtanh.pop %v281
    %284 = vrot.lane.b32.xlu0 %v282, 32
    %v285 = vpop.permute.xlu0 %284
    %v287 = vmul.f32 %v269, %v285
    %289 = vrot.lane.b32.xlu0 %v287, 64
    %v290 = vpop.permute.xlu0 %289
    %s292 = scalar_lea.vmem [#allocation2], 4
    %293 = vst.msk [vmem:[%s292] sm:$0xf] %vm224, %v290
    %s294 = scalar_lea.vmem [#allocation3], 8
    %v295 = vld [vmem:[%s294] sm:$0xf]
    %v296 = vsel %vm154, %v290, 0
    %298 = vmatpush.msra.mxu0 0.0
    %299 = vmatpush.msra.mxu0 0.0
    %300 = vmatpush.msra.mxu0 0.0
    %301 = vmatpush.msra.mxu0 0.0
    %302 = vmatpush.msra.mxu0 0.0
    %303 = vmatpush.msra.mxu0 0.0
    %304 = vmatpush.msra.mxu0 0.0
    %305 = vmatpush.msra.mxu0 0.0
    %306 = vmatpush.msra.mxu0 0.0
    %307 = vmatpush.msra.mxu0 0.0
    %308 = vmatpush.msra.mxu0 0.0
    %309 = vmatpush.msra.mxu0 0.0
    %310 = vmatpush.msra.mxu0 %v150
    %311 = vmatpush.msra.mxu0 %v149
    %312 = vmatpush.msra.mxu0 %v148
    %313 = vmatpush.msra.mxu0 %v147
    %314 = vmatmul.f32.gmra.mxu0 %v296
    %v315 = vpop.f32.mrf.mxu0
    %v316 = vadd.f32 0.0, %v315
    %317 = vdwg.mxu0
    %v318 = vadd.f32 %v295, %v316
    %v319 = vxor.u32 %v318, 2147483648
    %v320 = vmul.f32 %v319, 1.442695
    %v321 = vpow.pop %v320
    %v322 = vadd.f32 %v321, 1.0
    %v323 = vrcp.pop %v322
    %v324 = vmul.f32 %v322, %v323
    %v325 = vsub.f32 1.0, %v324
    %v326 = vmul.f32 %v323, %v325
    %v327 = vadd.f32 %v323, %v326
    %vm328 = vweird.f32 %v322
    %vm329 = vweird.f32 %v323
    %vm330 = vmor %vm328, %vm329
    %v331 = vsel %vm330, %v323, %v327
    %v332 = vand.u32 2147483647, %v322
    %vm333 = vcmp.eq.f32.partialorder %v332, 8.507059e+37
    %v334 = vand.u32 %v322, 2147483648
    %v335 = vor.u32 1.1754944e-38, %v334
    %v336 = vsel %vm333, %v335, %v331
    %v337 = vmul.f32 1.0, %v336
    %v338 = vtanh.pop %v318
    %v339 = vmul.f32 %v337, %v281
    %341 = vrot.lane.b32.xlu0 %v338, 32
    %v342 = vpop.permute.xlu0 %341
    %v344 = vmul.f32 %v337, %v342
    %346 = vrot.lane.b32.xlu0 %v344, 32
    %v347 = vpop.permute.xlu0 %346
    %v349 = vadd.f32 %v339, %v347
    %v350 = vtanh.pop %v349
    %352 = vrot.lane.b32.xlu0 %v350, 32
    %v353 = vpop.permute.xlu0 %352
    %v355 = vmul.f32 %v337, %v353
    %357 = vrot.lane.b32.xlu0 %v355, 64
    %v358 = vpop.permute.xlu0 %357
    %s360 = scalar_lea.vmem [#allocation2], 8
    %361 = vst.msk [vmem:[%s360] sm:$0xf] %vm224, %v358
    %s362 = scalar_lea.vmem [#allocation3], 12
    %v363 = vld [vmem:[%s362] sm:$0xf]
    %v364 = vsel %vm154, %v358, 0
    %366 = vmatpush.msra.mxu0 0.0
    %367 = vmatpush.msra.mxu0 0.0
    %368 = vmatpush.msra.mxu0 0.0
    %369 = vmatpush.msra.mxu0 0.0
    %370 = vmatpush.msra.mxu0 0.0
    %371 = vmatpush.msra.mxu0 0.0
    %372 = vmatpush.msra.mxu0 0.0
    %373 = vmatpush.msra.mxu0 0.0
    %374 = vmatpush.msra.mxu0 0.0
    %375 = vmatpush.msra.mxu0 0.0
    %376 = vmatpush.msra.mxu0 0.0
    %377 = vmatpush.msra.mxu0 0.0
    %378 = vmatpush.msra.mxu0 %v150
    %379 = vmatpush.msra.mxu0 %v149
    %380 = vmatpush.msra.mxu0 %v148
    %381 = vmatpush.msra.mxu0 %v147
    %382 = vmatmul.f32.gmra.mxu0 %v364
    %v383 = vpop.f32.mrf.mxu0
    %v384 = vadd.f32 0.0, %v383
    %385 = vdwg.mxu0
    %v386 = vadd.f32 %v363, %v384
    %v387 = vxor.u32 %v386, 2147483648
    %v388 = vmul.f32 %v387, 1.442695
    %v389 = vpow.pop %v388
    %v390 = vadd.f32 %v389, 1.0
    %v391 = vrcp.pop %v390
    %v392 = vmul.f32 %v390, %v391
    %v393 = vsub.f32 1.0, %v392
    %v394 = vmul.f32 %v391, %v393
    %v395 = vadd.f32 %v391, %v394
    %vm396 = vweird.f32 %v390
    %vm397 = vweird.f32 %v391
    %vm398 = vmor %vm396, %vm397
    %v399 = vsel %vm398, %v391, %v395
    %v400 = vand.u32 2147483647, %v390
    %vm401 = vcmp.eq.f32.partialorder %v400, 8.507059e+37
    %v402 = vand.u32 %v390, 2147483648
    %v403 = vor.u32 1.1754944e-38, %v402
    %v404 = vsel %vm401, %v403, %v399
    %v405 = vmul.f32 1.0, %v404
    %v406 = vtanh.pop %v386
    %v407 = vmul.f32 %v405, %v349
    %409 = vrot.lane.b32.xlu0 %v406, 32
    %v410 = vpop.permute.xlu0 %409
    %v412 = vmul.f32 %v405, %v410
    %414 = vrot.lane.b32.xlu0 %v412, 32
    %v415 = vpop.permute.xlu0 %414
    %v417 = vadd.f32 %v407, %v415
    %v418 = vtanh.pop %v417
    %420 = vrot.lane.b32.xlu0 %v418, 32
    %v421 = vpop.permute.xlu0 %420
    %v423 = vmul.f32 %v405, %v421
    %425 = vrot.lane.b32.xlu0 %v423, 64
    %v426 = vpop.permute.xlu0 %425
    %s428 = scalar_lea.vmem [#allocation2], 12
    %429 = vst.msk [vmem:[%s428] sm:$0xf] %vm224, %v426
    %s430 = scalar_lea.vmem [#allocation3], 16
    %v431 = vld [vmem:[%s430] sm:$0xf]
    %v432 = vsel %vm154, %v426, 0
    %434 = vmatpush.msra.mxu0 0.0
    %435 = vmatpush.msra.mxu0 0.0
    %436 = vmatpush.msra.mxu0 0.0
    %437 = vmatpush.msra.mxu0 0.0
    %438 = vmatpush.msra.mxu0 0.0
    %439 = vmatpush.msra.mxu0 0.0
    %440 = vmatpush.msra.mxu0 0.0
    %441 = vmatpush.msra.mxu0 0.0
    %442 = vmatpush.msra.mxu0 0.0
    %443 = vmatpush.msra.mxu0 0.0
    %444 = vmatpush.msra.mxu0 0.0
    %445 = vmatpush.msra.mxu0 0.0
    %446 = vmatpush.msra.mxu0 %v150
    %447 = vmatpush.msra.mxu0 %v149
    %448 = vmatpush.msra.mxu0 %v148
    %449 = vmatpush.msra.mxu0 %v147
    %450 = vmatmul.f32.gmra.mxu0 %v432
    %v451 = vpop.f32.mrf.mxu0
    %v452 = vadd.f32 0.0, %v451
    %453 = vdwg.mxu0
    %v454 = vadd.f32 %v431, %v452
    %v455 = vxor.u32 %v454, 2147483648
    %v456 = vmul.f32 %v455, 1.442695
    %v457 = vpow.pop %v456
    %v458 = vadd.f32 %v457, 1.0
    %v459 = vrcp.pop %v458
    %v460 = vmul.f32 %v458, %v459
    %v461 = vsub.f32 1.0, %v460
    %v462 = vmul.f32 %v459, %v461
    %v463 = vadd.f32 %v459, %v462
    %vm464 = vweird.f32 %v458
    %vm465 = vweird.f32 %v459
    %vm466 = vmor %vm464, %vm465
    %v467 = vsel %vm466, %v459, %v463
    %v468 = vand.u32 2147483647, %v458
    %vm469 = vcmp.eq.f32.partialorder %v468, 8.507059e+37
    %v470 = vand.u32 %v458, 2147483648
    %v471 = vor.u32 1.1754944e-38, %v470
    %v472 = vsel %vm469, %v471, %v467
    %v473 = vmul.f32 1.0, %v472
    %v474 = vtanh.pop %v454
    %v475 = vmul.f32 %v473, %v417
    %477 = vrot.lane.b32.xlu0 %v474, 32
    %v478 = vpop.permute.xlu0 %477
    %v480 = vmul.f32 %v473, %v478
    %482 = vrot.lane.b32.xlu0 %v480, 32
    %v483 = vpop.permute.xlu0 %482
    %v485 = vadd.f32 %v475, %v483
    %v486 = vtanh.pop %v485
    %488 = vrot.lane.b32.xlu0 %v486, 32
    %v489 = vpop.permute.xlu0 %488
    %v491 = vmul.f32 %v473, %v489
    %493 = vrot.lane.b32.xlu0 %v491, 64
    %v494 = vpop.permute.xlu0 %493
    %s496 = scalar_lea.vmem [#allocation2], 16
    %497 = vst.msk [vmem:[%s496] sm:$0xf] %vm224, %v494
    %s498 = scalar_lea.vmem [#allocation3], 20
    %v499 = vld [vmem:[%s498] sm:$0xf]
    %v500 = vsel %vm154, %v494, 0
    %502 = vmatpush.msra.mxu0 0.0
    %503 = vmatpush.msra.mxu0 0.0
    %504 = vmatpush.msra.mxu0 0.0
    %505 = vmatpush.msra.mxu0 0.0
    %506 = vmatpush.msra.mxu0 0.0
    %507 = vmatpush.msra.mxu0 0.0
    %508 = vmatpush.msra.mxu0 0.0
    %509 = vmatpush.msra.mxu0 0.0
    %510 = vmatpush.msra.mxu0 0.0
    %511 = vmatpush.msra.mxu0 0.0
    %512 = vmatpush.msra.mxu0 0.0
    %513 = vmatpush.msra.mxu0 0.0
    %514 = vmatpush.msra.mxu0 %v150
    %515 = vmatpush.msra.mxu0 %v149
    %516 = vmatpush.msra.mxu0 %v148
    %517 = vmatpush.msra.mxu0 %v147
    %518 = vmatmul.f32.gmra.mxu0 %v500
    %v519 = vpop.f32.mrf.mxu0
    %v520 = vadd.f32 0.0, %v519
    %521 = vdwg.mxu0
    %v522 = vadd.f32 %v499, %v520
    %v523 = vxor.u32 %v522, 2147483648
    %v524 = vmul.f32 %v523, 1.442695
    %v525 = vpow.pop %v524
    %v526 = vadd.f32 %v525, 1.0
    %v527 = vrcp.pop %v526
    %v528 = vmul.f32 %v526, %v527
    %v529 = vsub.f32 1.0, %v528
    %v530 = vmul.f32 %v527, %v529
    %v531 = vadd.f32 %v527, %v530
    %vm532 = vweird.f32 %v526
    %vm533 = vweird.f32 %v527
    %vm534 = vmor %vm532, %vm533
    %v535 = vsel %vm534, %v527, %v531
    %v536 = vand.u32 2147483647, %v526
    %vm537 = vcmp.eq.f32.partialorder %v536, 8.507059e+37
    %v538 = vand.u32 %v526, 2147483648
    %v539 = vor.u32 1.1754944e-38, %v538
    %v540 = vsel %vm537, %v539, %v535
    %v541 = vmul.f32 1.0, %v540
    %v542 = vtanh.pop %v522
    %v543 = vmul.f32 %v541, %v485
    %545 = vrot.lane.b32.xlu0 %v542, 32
    %v546 = vpop.permute.xlu0 %545
    %v548 = vmul.f32 %v541, %v546
    %550 = vrot.lane.b32.xlu0 %v548, 32
    %v551 = vpop.permute.xlu0 %550
    %v553 = vadd.f32 %v543, %v551
    %v554 = vtanh.pop %v553
    %556 = vrot.lane.b32.xlu0 %v554, 32
    %v557 = vpop.permute.xlu0 %556
    %v559 = vmul.f32 %v541, %v557
    %561 = vrot.lane.b32.xlu0 %v559, 64
    %v562 = vpop.permute.xlu0 %561
    %s564 = scalar_lea.vmem [#allocation2], 20
    %565 = vst.msk [vmem:[%s564] sm:$0xf] %vm224, %v562
    %s566 = scalar_lea.vmem [#allocation3], 24
    %v567 = vld [vmem:[%s566] sm:$0xf]
    %v568 = vsel %vm154, %v562, 0
    %570 = vmatpush.msra.mxu0 0.0
    %571 = vmatpush.msra.mxu0 0.0
    %572 = vmatpush.msra.mxu0 0.0
    %573 = vmatpush.msra.mxu0 0.0
    %574 = vmatpush.msra.mxu0 0.0
    %575 = vmatpush.msra.mxu0 0.0
    %576 = vmatpush.msra.mxu0 0.0
    %577 = vmatpush.msra.mxu0 0.0
    %578 = vmatpush.msra.mxu0 0.0
    %579 = vmatpush.msra.mxu0 0.0
    %580 = vmatpush.msra.mxu0 0.0
    %581 = vmatpush.msra.mxu0 0.0
    %582 = vmatpush.msra.mxu0 %v150
    %583 = vmatpush.msra.mxu0 %v149
    %584 = vmatpush.msra.mxu0 %v148
    %585 = vmatpush.msra.mxu0 %v147
    %586 = vmatmul.f32.gmra.mxu0 %v568
    %v587 = vpop.f32.mrf.mxu0
    %v588 = vadd.f32 0.0, %v587
    %589 = vdwg.mxu0
    %v590 = vadd.f32 %v567, %v588
    %v591 = vxor.u32 %v590, 2147483648
    %v592 = vmul.f32 %v591, 1.442695
    %v593 = vpow.pop %v592
    %v594 = vadd.f32 %v593, 1.0
    %v595 = vrcp.pop %v594
    %v596 = vmul.f32 %v594, %v595
    %v597 = vsub.f32 1.0, %v596
    %v598 = vmul.f32 %v595, %v597
    %v599 = vadd.f32 %v595, %v598
    %vm600 = vweird.f32 %v594
    %vm601 = vweird.f32 %v595
    %vm602 = vmor %vm600, %vm601
    %v603 = vsel %vm602, %v595, %v599
    %v604 = vand.u32 2147483647, %v594
    %vm605 = vcmp.eq.f32.partialorder %v604, 8.507059e+37
    %v606 = vand.u32 %v594, 2147483648
    %v607 = vor.u32 1.1754944e-38, %v606
    %v608 = vsel %vm605, %v607, %v603
    %v609 = vmul.f32 1.0, %v608
    %v610 = vtanh.pop %v590
    %v611 = vmul.f32 %v609, %v553
    %613 = vrot.lane.b32.xlu0 %v610, 32
    %v614 = vpop.permute.xlu0 %613
    %v616 = vmul.f32 %v609, %v614
    %618 = vrot.lane.b32.xlu0 %v616, 32
    %v619 = vpop.permute.xlu0 %618
    %v621 = vadd.f32 %v611, %v619
    %v622 = vtanh.pop %v621
    %624 = vrot.lane.b32.xlu0 %v622, 32
    %v625 = vpop.permute.xlu0 %624
    %v627 = vmul.f32 %v609, %v625
    %629 = vrot.lane.b32.xlu0 %v627, 64
    %v630 = vpop.permute.xlu0 %629
    %s632 = scalar_lea.vmem [#allocation2], 24
    %633 = vst.msk [vmem:[%s632] sm:$0xf] %vm224, %v630
    %s634 = scalar_lea.vmem [#allocation3], 28
    %v635 = vld [vmem:[%s634] sm:$0xf]
    %v636 = vsel %vm154, %v630, 0
    %638 = vmatpush.msra.mxu0 0.0
    %639 = vmatpush.msra.mxu0 0.0
    %640 = vmatpush.msra.mxu0 0.0
    %641 = vmatpush.msra.mxu0 0.0
    %642 = vmatpush.msra.mxu0 0.0
    %643 = vmatpush.msra.mxu0 0.0
    %644 = vmatpush.msra.mxu0 0.0
    %645 = vmatpush.msra.mxu0 0.0
    %646 = vmatpush.msra.mxu0 0.0
    %647 = vmatpush.msra.mxu0 0.0
    %648 = vmatpush.msra.mxu0 0.0
    %649 = vmatpush.msra.mxu0 0.0
    %650 = vmatpush.msra.mxu0 %v150
    %651 = vmatpush.msra.mxu0 %v149
    %652 = vmatpush.msra.mxu0 %v148
    %653 = vmatpush.msra.mxu0 %v147
    %654 = vmatmul.f32.gmra.mxu0 %v636
    %v655 = vpop.f32.mrf.mxu0
    %v656 = vadd.f32 0.0, %v655
    %657 = vdwg.mxu0
    %v658 = vadd.f32 %v635, %v656
    %v659 = vxor.u32 %v658, 2147483648
    %v660 = vmul.f32 %v659, 1.442695
    %v661 = vpow.pop %v660
    %v662 = vadd.f32 %v661, 1.0
    %v663 = vrcp.pop %v662
    %v664 = vmul.f32 %v662, %v663
    %v665 = vsub.f32 1.0, %v664
    %v666 = vmul.f32 %v663, %v665
    %v667 = vadd.f32 %v663, %v666
    %vm668 = vweird.f32 %v662
    %vm669 = vweird.f32 %v663
    %vm670 = vmor %vm668, %vm669
    %v671 = vsel %vm670, %v663, %v667
    %v672 = vand.u32 2147483647, %v662
    %vm673 = vcmp.eq.f32.partialorder %v672, 8.507059e+37
    %v674 = vand.u32 %v662, 2147483648
    %v675 = vor.u32 1.1754944e-38, %v674
    %v676 = vsel %vm673, %v675, %v671
    %v677 = vmul.f32 1.0, %v676
    %v678 = vtanh.pop %v658
    %v679 = vmul.f32 %v677, %v621
    %681 = vrot.lane.b32.xlu0 %v678, 32
    %v682 = vpop.permute.xlu0 %681
    %v684 = vmul.f32 %v677, %v682
    %686 = vrot.lane.b32.xlu0 %v684, 32
    %v687 = vpop.permute.xlu0 %686
    %v689 = vadd.f32 %v679, %v687
    %v690 = vtanh.pop %v689
    %692 = vrot.lane.b32.xlu0 %v690, 32
    %v693 = vpop.permute.xlu0 %692
    %v695 = vmul.f32 %v677, %v693
    %697 = vrot.lane.b32.xlu0 %v695, 64
    %v698 = vpop.permute.xlu0 %697
    %s700 = scalar_lea.vmem [#allocation2], 28
    %701 = vst.msk [vmem:[%s700] sm:$0xf] %vm224, %v698
    %702 = vst.msk [vmem:[#allocation4] sm:$0xf] %vm224, %v698
    %704 = vrot.lane.b32.xlu0 %v689, 96
    %v705 = vpop.permute.xlu0 %704
    %707 = vst.msk [vmem:[#allocation5] sm:$0xf] %vm224, %v705
    %v708 = vld [vmem:[#allocation2] sm:$0xff]
    %v709 = vld [vmem:[#allocation2 + $0x8] sm:$0xff]
    %v710 = vld [vmem:[#allocation2 + $0x10] sm:$0xff]
    %v711 = vld [vmem:[#allocation2 + $0x18] sm:$0xff]
    %v712 = vld [vmem:[%s2] sm:$0xff]
    %v713 = vld [vmem:[%s2 + $0x8] sm:$0xff]
    %v714 = vld [vmem:[%s2 + $0x10] sm:$0xff]
    %v715 = vld [vmem:[%s2 + $0x18] sm:$0xff]
    %s716 = scalar_lea.vmem %s4, 1
    %v717 = vld [vmem:[%s716] sm:$0x1]
    %v719 = vperm.slane %v717, 0
    %v722 = vsel %vm154, %v708, 0
    %v725 = vsel %vm154, %v709, 0
    %v728 = vsel %vm154, %v710, 0
    %v731 = vsel %vm154, %v711, 0
    %733 = vmatpush.msra.mxu0 0.0
    %734 = vmatpush.msra.mxu0 0.0
    %735 = vmatpush.msra.mxu0 0.0
    %736 = vmatpush.msra.mxu0 0.0
    %737 = vmatpush.msra.mxu0 0.0
    %738 = vmatpush.msra.mxu0 0.0
    %739 = vmatpush.msra.mxu0 0.0
    %740 = vmatpush.msra.mxu0 0.0
    %741 = vmatpush.msra.mxu0 0.0
    %742 = vmatpush.msra.mxu0 0.0
    %743 = vmatpush.msra.mxu0 0.0
    %744 = vmatpush.msra.mxu0 0.0
    %745 = vmatpush.msra.mxu0 %v715
    %746 = vmatpush.msra.mxu0 %v714
    %747 = vmatpush.msra.mxu0 %v713
    %748 = vmatpush.msra.mxu0 %v712
    %749 = vmatmul.f32.gmra.mxu0 %v722
    %v750 = vpop.f32.mrf.mxu0
    %v751 = vadd.f32 %v719, %v750
    %752 = vmatmul.f32.gmra.mxu0 %v725
    %v753 = vpop.f32.mrf.mxu0
    %v754 = vadd.f32 %v719, %v753
    %755 = vmatmul.f32.gmra.mxu0 %v728
    %v756 = vpop.f32.mrf.mxu0
    %v757 = vadd.f32 %v719, %v756
    %758 = vmatmul.f32.gmra.mxu0 %v731
    %v759 = vpop.f32.mrf.mxu0
    %v760 = vadd.f32 %v719, %v759
    %761 = vdwg.mxu0
    %762 = vst [vmem:[#allocation3] sm:$0xff] %v751
    %763 = vst [vmem:[#allocation3 + $0x8] sm:$0xff] %v754
    %764 = vst [vmem:[#allocation3 + $0x10] sm:$0xff] %v757
    %765 = vst [vmem:[#allocation3 + $0x18] sm:$0xff] %v760
    %s766 = scalar_lea.vmem [#allocation6], 32
    %v767 = vld [vmem:[%s766] sm:$0xff]
    %v768 = vld [vmem:[%s766 + $0x8] sm:$0xff]
    %v769 = vld [vmem:[%s766 + $0x10] sm:$0xff]
    %v770 = vld [vmem:[%s766 + $0x18] sm:$0xff]
    %s771 = scalar_lea.vmem [#allocation4], 4
    %v772 = vld [vmem:[%s771] sm:$0xf]
    %s773 = scalar_lea.vmem [#allocation5], 4
    %v774 = vld [vmem:[%s773] sm:$0xf]
    %v775 = vld [vmem:[#allocation3] sm:$0xf]
    %v777 = vsel %vm154, %v772, 0
    %779 = vmatpush.msra.mxu0 0.0
    %780 = vmatpush.msra.mxu0 0.0
    %781 = vmatpush.msra.mxu0 0.0
    %782 = vmatpush.msra.mxu0 0.0
    %783 = vmatpush.msra.mxu0 0.0
    %784 = vmatpush.msra.mxu0 0.0
    %785 = vmatpush.msra.mxu0 0.0
    %786 = vmatpush.msra.mxu0 0.0
    %787 = vmatpush.msra.mxu0 0.0
    %788 = vmatpush.msra.mxu0 0.0
    %789 = vmatpush.msra.mxu0 0.0
    %790 = vmatpush.msra.mxu0 0.0
    %791 = vmatpush.msra.mxu0 %v770
    %792 = vmatpush.msra.mxu0 %v769
    %793 = vmatpush.msra.mxu0 %v768
    %794 = vmatpush.msra.mxu0 %v767
    %795 = vmatmul.f32.gmra.mxu0 %v777
    %v796 = vpop.f32.mrf.mxu0
    %v797 = vadd.f32 0.0, %v796
    %798 = vdwg.mxu0
    %v799 = vadd.f32 %v775, %v797
    %v800 = vxor.u32 %v799, 2147483648
    %v801 = vmul.f32 %v800, 1.442695
    %v802 = vpow.pop %v801
    %v803 = vadd.f32 %v802, 1.0
    %v804 = vrcp.pop %v803
    %v805 = vmul.f32 %v803, %v804
    %v806 = vsub.f32 1.0, %v805
    %v807 = vmul.f32 %v804, %v806
    %v808 = vadd.f32 %v804, %v807
    %vm809 = vweird.f32 %v803
    %vm810 = vweird.f32 %v804
    %vm811 = vmor %vm809, %vm810
    %v812 = vsel %vm811, %v804, %v808
    %v813 = vand.u32 2147483647, %v803
    %vm814 = vcmp.eq.f32.partialorder %v813, 8.507059e+37
    %v815 = vand.u32 %v803, 2147483648
    %v816 = vor.u32 1.1754944e-38, %v815
    %v817 = vsel %vm814, %v816, %v812
    %v818 = vmul.f32 1.0, %v817
    %v819 = vtanh.pop %v799
    %821 = vrot.lane.b32.xlu0 %v774, 32
    %v822 = vpop.permute.xlu0 %821
    %v824 = vmul.f32 %v818, %v822
    %826 = vrot.lane.b32.xlu0 %v819, 32
    %v827 = vpop.permute.xlu0 %826
    %v829 = vmul.f32 %v818, %v827
    %831 = vrot.lane.b32.xlu0 %v829, 32
    %v832 = vpop.permute.xlu0 %831
    %v834 = vadd.f32 %v824, %v832
    %v835 = vtanh.pop %v834
    %837 = vrot.lane.b32.xlu0 %v835, 32
    %v838 = vpop.permute.xlu0 %837
    %v840 = vmul.f32 %v818, %v838
    %842 = vrot.lane.b32.xlu0 %v840, 64
    %v843 = vpop.permute.xlu0 %842
    %845 = vst.msk [vmem:[#allocation2] sm:$0xf] %vm224, %v843
    %v846 = vld [vmem:[%s226] sm:$0xf]
    %v847 = vsel %vm154, %v843, 0
    %849 = vmatpush.msra.mxu0 0.0
    %850 = vmatpush.msra.mxu0 0.0
    %851 = vmatpush.msra.mxu0 0.0
    %852 = vmatpush.msra.mxu0 0.0
    %853 = vmatpush.msra.mxu0 0.0
    %854 = vmatpush.msra.mxu0 0.0
    %855 = vmatpush.msra.mxu0 0.0
    %856 = vmatpush.msra.mxu0 0.0
    %857 = vmatpush.msra.mxu0 0.0
    %858 = vmatpush.msra.mxu0 0.0
    %859 = vmatpush.msra.mxu0 0.0
    %860 = vmatpush.msra.mxu0 0.0
    %861 = vmatpush.msra.mxu0 %v770
    %862 = vmatpush.msra.mxu0 %v769
    %863 = vmatpush.msra.mxu0 %v768
    %864 = vmatpush.msra.mxu0 %v767
    %865 = vmatmul.f32.gmra.mxu0 %v847
    %v866 = vpop.f32.mrf.mxu0
    %v867 = vadd.f32 0.0, %v866
    %868 = vdwg.mxu0
    %v869 = vadd.f32 %v846, %v867
    %v870 = vxor.u32 %v869, 2147483648
    %v871 = vmul.f32 %v870, 1.442695
    %v872 = vpow.pop %v871
    %v873 = vadd.f32 %v872, 1.0
    %v874 = vrcp.pop %v873
    %v875 = vmul.f32 %v873, %v874
    %v876 = vsub.f32 1.0, %v875
    %v877 = vmul.f32 %v874, %v876
    %v878 = vadd.f32 %v874, %v877
    %vm879 = vweird.f32 %v873
    %vm880 = vweird.f32 %v874
    %vm881 = vmor %vm879, %vm880
    %v882 = vsel %vm881, %v874, %v878
    %v883 = vand.u32 2147483647, %v873
    %vm884 = vcmp.eq.f32.partialorder %v883, 8.507059e+37
    %v885 = vand.u32 %v873, 2147483648
    %v886 = vor.u32 1.1754944e-38, %v885
    %v887 = vsel %vm884, %v886, %v882
    %v888 = vmul.f32 1.0, %v887
    %v889 = vtanh.pop %v869
    %v890 = vmul.f32 %v888, %v834
    %892 = vrot.lane.b32.xlu0 %v889, 32
    %v893 = vpop.permute.xlu0 %892
    %v895 = vmul.f32 %v888, %v893
    %897 = vrot.lane.b32.xlu0 %v895, 32
    %v898 = vpop.permute.xlu0 %897
    %v900 = vadd.f32 %v890, %v898
    %v901 = vtanh.pop %v900
    %903 = vrot.lane.b32.xlu0 %v901, 32
    %v904 = vpop.permute.xlu0 %903
    %v906 = vmul.f32 %v888, %v904
    %908 = vrot.lane.b32.xlu0 %v906, 64
    %v909 = vpop.permute.xlu0 %908
    %911 = vst.msk [vmem:[%s292] sm:$0xf] %vm224, %v909
    %v912 = vld [vmem:[%s294] sm:$0xf]
    %v913 = vsel %vm154, %v909, 0
    %915 = vmatpush.msra.mxu0 0.0
    %916 = vmatpush.msra.mxu0 0.0
    %917 = vmatpush.msra.mxu0 0.0
    %918 = vmatpush.msra.mxu0 0.0
    %919 = vmatpush.msra.mxu0 0.0
    %920 = vmatpush.msra.mxu0 0.0
    %921 = vmatpush.msra.mxu0 0.0
    %922 = vmatpush.msra.mxu0 0.0
    %923 = vmatpush.msra.mxu0 0.0
    %924 = vmatpush.msra.mxu0 0.0
    %925 = vmatpush.msra.mxu0 0.0
    %926 = vmatpush.msra.mxu0 0.0
    %927 = vmatpush.msra.mxu0 %v770
    %928 = vmatpush.msra.mxu0 %v769
    %929 = vmatpush.msra.mxu0 %v768
    %930 = vmatpush.msra.mxu0 %v767
    %931 = vmatmul.f32.gmra.mxu0 %v913
    %v932 = vpop.f32.mrf.mxu0
    %v933 = vadd.f32 0.0, %v932
    %934 = vdwg.mxu0
    %v935 = vadd.f32 %v912, %v933
    %v936 = vxor.u32 %v935, 2147483648
    %v937 = vmul.f32 %v936, 1.442695
    %v938 = vpow.pop %v937
    %v939 = vadd.f32 %v938, 1.0
    %v940 = vrcp.pop %v939
    %v941 = vmul.f32 %v939, %v940
    %v942 = vsub.f32 1.0, %v941
    %v943 = vmul.f32 %v940, %v942
    %v944 = vadd.f32 %v940, %v943
    %vm945 = vweird.f32 %v939
    %vm946 = vweird.f32 %v940
    %vm947 = vmor %vm945, %vm946
    %v948 = vsel %vm947, %v940, %v944
    %v949 = vand.u32 2147483647, %v939
    %vm950 = vcmp.eq.f32.partialorder %v949, 8.507059e+37
    %v951 = vand.u32 %v939, 2147483648
    %v952 = vor.u32 1.1754944e-38, %v951
    %v953 = vsel %vm950, %v952, %v948
    %v954 = vmul.f32 1.0, %v953
    %v955 = vtanh.pop %v935
    %v956 = vmul.f32 %v954, %v900
    %958 = vrot.lane.b32.xlu0 %v955, 32
    %v959 = vpop.permute.xlu0 %958
    %v961 = vmul.f32 %v954, %v959
    %963 = vrot.lane.b32.xlu0 %v961, 32
    %v964 = vpop.permute.xlu0 %963
    %v966 = vadd.f32 %v956, %v964
    %v967 = vtanh.pop %v966
    %969 = vrot.lane.b32.xlu0 %v967, 32
    %v970 = vpop.permute.xlu0 %969
    %v972 = vmul.f32 %v954, %v970
    %974 = vrot.lane.b32.xlu0 %v972, 64
    %v975 = vpop.permute.xlu0 %974
    %977 = vst.msk [vmem:[%s360] sm:$0xf] %vm224, %v975
    %v978 = vld [vmem:[%s362] sm:$0xf]
    %v979 = vsel %vm154, %v975, 0
    %981 = vmatpush.msra.mxu0 0.0
    %982 = vmatpush.msra.mxu0 0.0
    %983 = vmatpush.msra.mxu0 0.0
    %984 = vmatpush.msra.mxu0 0.0
    %985 = vmatpush.msra.mxu0 0.0
    %986 = vmatpush.msra.mxu0 0.0
    %987 = vmatpush.msra.mxu0 0.0
    %988 = vmatpush.msra.mxu0 0.0
    %989 = vmatpush.msra.mxu0 0.0
    %990 = vmatpush.msra.mxu0 0.0
    %991 = vmatpush.msra.mxu0 0.0
    %992 = vmatpush.msra.mxu0 0.0
    %993 = vmatpush.msra.mxu0 %v770
    %994 = vmatpush.msra.mxu0 %v769
    %995 = vmatpush.msra.mxu0 %v768
    %996 = vmatpush.msra.mxu0 %v767
    %997 = vmatmul.f32.gmra.mxu0 %v979
    %v998 = vpop.f32.mrf.mxu0
    %v999 = vadd.f32 0.0, %v998
    %1000 = vdwg.mxu0
    %v1001 = vadd.f32 %v978, %v999
    %v1002 = vxor.u32 %v1001, 2147483648
    %v1003 = vmul.f32 %v1002, 1.442695
    %v1004 = vpow.pop %v1003
    %v1005 = vadd.f32 %v1004, 1.0
    %v1006 = vrcp.pop %v1005
    %v1007 = vmul.f32 %v1005, %v1006
    %v1008 = vsub.f32 1.0, %v1007
    %v1009 = vmul.f32 %v1006, %v1008
    %v1010 = vadd.f32 %v1006, %v1009
    %vm1011 = vweird.f32 %v1005
    %vm1012 = vweird.f32 %v1006
    %vm1013 = vmor %vm1011, %vm1012
    %v1014 = vsel %vm1013, %v1006, %v1010
    %v1015 = vand.u32 2147483647, %v1005
    %vm1016 = vcmp.eq.f32.partialorder %v1015, 8.507059e+37
    %v1017 = vand.u32 %v1005, 2147483648
    %v1018 = vor.u32 1.1754944e-38, %v1017
    %v1019 = vsel %vm1016, %v1018, %v1014
    %v1020 = vmul.f32 1.0, %v1019
    %v1021 = vtanh.pop %v1001
    %v1022 = vmul.f32 %v1020, %v966
    %1024 = vrot.lane.b32.xlu0 %v1021, 32
    %v1025 = vpop.permute.xlu0 %1024
    %v1027 = vmul.f32 %v1020, %v1025
    %1029 = vrot.lane.b32.xlu0 %v1027, 32
    %v1030 = vpop.permute.xlu0 %1029
    %v1032 = vadd.f32 %v1022, %v1030
    %v1033 = vtanh.pop %v1032
    %1035 = vrot.lane.b32.xlu0 %v1033, 32
    %v1036 = vpop.permute.xlu0 %1035
    %v1038 = vmul.f32 %v1020, %v1036
    %1040 = vrot.lane.b32.xlu0 %v1038, 64
    %v1041 = vpop.permute.xlu0 %1040
    %1043 = vst.msk [vmem:[%s428] sm:$0xf] %vm224, %v1041
    %v1044 = vld [vmem:[%s430] sm:$0xf]
    %v1045 = vsel %vm154, %v1041, 0
    %1047 = vmatpush.msra.mxu0 0.0
    %1048 = vmatpush.msra.mxu0 0.0
    %1049 = vmatpush.msra.mxu0 0.0
    %1050 = vmatpush.msra.mxu0 0.0
    %1051 = vmatpush.msra.mxu0 0.0
    %1052 = vmatpush.msra.mxu0 0.0
    %1053 = vmatpush.msra.mxu0 0.0
    %1054 = vmatpush.msra.mxu0 0.0
    %1055 = vmatpush.msra.mxu0 0.0
    %1056 = vmatpush.msra.mxu0 0.0
    %1057 = vmatpush.msra.mxu0 0.0
    %1058 = vmatpush.msra.mxu0 0.0
    %1059 = vmatpush.msra.mxu0 %v770
    %1060 = vmatpush.msra.mxu0 %v769
    %1061 = vmatpush.msra.mxu0 %v768
    %1062 = vmatpush.msra.mxu0 %v767
    %1063 = vmatmul.f32.gmra.mxu0 %v1045
    %v1064 = vpop.f32.mrf.mxu0
    %v1065 = vadd.f32 0.0, %v1064
    %1066 = vdwg.mxu0
    %v1067 = vadd.f32 %v1044, %v1065
    %v1068 = vxor.u32 %v1067, 2147483648
    %v1069 = vmul.f32 %v1068, 1.442695
    %v1070 = vpow.pop %v1069
    %v1071 = vadd.f32 %v1070, 1.0
    %v1072 = vrcp.pop %v1071
    %v1073 = vmul.f32 %v1071, %v1072
    %v1074 = vsub.f32 1.0, %v1073
    %v1075 = vmul.f32 %v1072, %v1074
    %v1076 = vadd.f32 %v1072, %v1075
    %vm1077 = vweird.f32 %v1071
    %vm1078 = vweird.f32 %v1072
    %vm1079 = vmor %vm1077, %vm1078
    %v1080 = vsel %vm1079, %v1072, %v1076
    %v1081 = vand.u32 2147483647, %v1071
    %vm1082 = vcmp.eq.f32.partialorder %v1081, 8.507059e+37
    %v1083 = vand.u32 %v1071, 2147483648
    %v1084 = vor.u32 1.1754944e-38, %v1083
    %v1085 = vsel %vm1082, %v1084, %v1080
    %v1086 = vmul.f32 1.0, %v1085
    %v1087 = vtanh.pop %v1067
    %v1088 = vmul.f32 %v1086, %v1032
    %1090 = vrot.lane.b32.xlu0 %v1087, 32
    %v1091 = vpop.permute.xlu0 %1090
    %v1093 = vmul.f32 %v1086, %v1091
    %1095 = vrot.lane.b32.xlu0 %v1093, 32
    %v1096 = vpop.permute.xlu0 %1095
    %v1098 = vadd.f32 %v1088, %v1096
    %v1099 = vtanh.pop %v1098
    %1101 = vrot.lane.b32.xlu0 %v1099, 32
    %v1102 = vpop.permute.xlu0 %1101
    %v1104 = vmul.f32 %v1086, %v1102
    %1106 = vrot.lane.b32.xlu0 %v1104, 64
    %v1107 = vpop.permute.xlu0 %1106
    %1109 = vst.msk [vmem:[%s496] sm:$0xf] %vm224, %v1107
    %v1110 = vld [vmem:[%s498] sm:$0xf]
    %v1111 = vsel %vm154, %v1107, 0
    %1113 = vmatpush.msra.mxu0 0.0
    %1114 = vmatpush.msra.mxu0 0.0
    %1115 = vmatpush.msra.mxu0 0.0
    %1116 = vmatpush.msra.mxu0 0.0
    %1117 = vmatpush.msra.mxu0 0.0
    %1118 = vmatpush.msra.mxu0 0.0
    %1119 = vmatpush.msra.mxu0 0.0
    %1120 = vmatpush.msra.mxu0 0.0
    %1121 = vmatpush.msra.mxu0 0.0
    %1122 = vmatpush.msra.mxu0 0.0
    %1123 = vmatpush.msra.mxu0 0.0
    %1124 = vmatpush.msra.mxu0 0.0
    %1125 = vmatpush.msra.mxu0 %v770
    %1126 = vmatpush.msra.mxu0 %v769
    %1127 = vmatpush.msra.mxu0 %v768
    %1128 = vmatpush.msra.mxu0 %v767
    %1129 = vmatmul.f32.gmra.mxu0 %v1111
    %v1130 = vpop.f32.mrf.mxu0
    %v1131 = vadd.f32 0.0, %v1130
    %1132 = vdwg.mxu0
    %v1133 = vadd.f32 %v1110, %v1131
    %v1134 = vxor.u32 %v1133, 2147483648
    %v1135 = vmul.f32 %v1134, 1.442695
    %v1136 = vpow.pop %v1135
    %v1137 = vadd.f32 %v1136, 1.0
    %v1138 = vrcp.pop %v1137
    %v1139 = vmul.f32 %v1137, %v1138
    %v1140 = vsub.f32 1.0, %v1139
    %v1141 = vmul.f32 %v1138, %v1140
    %v1142 = vadd.f32 %v1138, %v1141
    %vm1143 = vweird.f32 %v1137
    %vm1144 = vweird.f32 %v1138
    %vm1145 = vmor %vm1143, %vm1144
    %v1146 = vsel %vm1145, %v1138, %v1142
    %v1147 = vand.u32 2147483647, %v1137
    %vm1148 = vcmp.eq.f32.partialorder %v1147, 8.507059e+37
    %v1149 = vand.u32 %v1137, 2147483648
    %v1150 = vor.u32 1.1754944e-38, %v1149
    %v1151 = vsel %vm1148, %v1150, %v1146
    %v1152 = vmul.f32 1.0, %v1151
    %v1153 = vtanh.pop %v1133
    %v1154 = vmul.f32 %v1152, %v1098
    %1156 = vrot.lane.b32.xlu0 %v1153, 32
    %v1157 = vpop.permute.xlu0 %1156
    %v1159 = vmul.f32 %v1152, %v1157
    %1161 = vrot.lane.b32.xlu0 %v1159, 32
    %v1162 = vpop.permute.xlu0 %1161
    %v1164 = vadd.f32 %v1154, %v1162
    %v1165 = vtanh.pop %v1164
    %1167 = vrot.lane.b32.xlu0 %v1165, 32
    %v1168 = vpop.permute.xlu0 %1167
    %v1170 = vmul.f32 %v1152, %v1168
    %1172 = vrot.lane.b32.xlu0 %v1170, 64
    %v1173 = vpop.permute.xlu0 %1172
    %1175 = vst.msk [vmem:[%s564] sm:$0xf] %vm224, %v1173
    %v1176 = vld [vmem:[%s566] sm:$0xf]
    %v1177 = vsel %vm154, %v1173, 0
    %1179 = vmatpush.msra.mxu0 0.0
    %1180 = vmatpush.msra.mxu0 0.0
    %1181 = vmatpush.msra.mxu0 0.0
    %1182 = vmatpush.msra.mxu0 0.0
    %1183 = vmatpush.msra.mxu0 0.0
    %1184 = vmatpush.msra.mxu0 0.0
    %1185 = vmatpush.msra.mxu0 0.0
    %1186 = vmatpush.msra.mxu0 0.0
    %1187 = vmatpush.msra.mxu0 0.0
    %1188 = vmatpush.msra.mxu0 0.0
    %1189 = vmatpush.msra.mxu0 0.0
    %1190 = vmatpush.msra.mxu0 0.0
    %1191 = vmatpush.msra.mxu0 %v770
    %1192 = vmatpush.msra.mxu0 %v769
    %1193 = vmatpush.msra.mxu0 %v768
    %1194 = vmatpush.msra.mxu0 %v767
    %1195 = vmatmul.f32.gmra.mxu0 %v1177
    %v1196 = vpop.f32.mrf.mxu0
    %v1197 = vadd.f32 0.0, %v1196
    %1198 = vdwg.mxu0
    %v1199 = vadd.f32 %v1176, %v1197
    %v1200 = vxor.u32 %v1199, 2147483648
    %v1201 = vmul.f32 %v1200, 1.442695
    %v1202 = vpow.pop %v1201
    %v1203 = vadd.f32 %v1202, 1.0
    %v1204 = vrcp.pop %v1203
    %v1205 = vmul.f32 %v1203, %v1204
    %v1206 = vsub.f32 1.0, %v1205
    %v1207 = vmul.f32 %v1204, %v1206
    %v1208 = vadd.f32 %v1204, %v1207
    %vm1209 = vweird.f32 %v1203
    %vm1210 = vweird.f32 %v1204
    %vm1211 = vmor %vm1209, %vm1210
    %v1212 = vsel %vm1211, %v1204, %v1208
    %v1213 = vand.u32 2147483647, %v1203
    %vm1214 = vcmp.eq.f32.partialorder %v1213, 8.507059e+37
    %v1215 = vand.u32 %v1203, 2147483648
    %v1216 = vor.u32 1.1754944e-38, %v1215
    %v1217 = vsel %vm1214, %v1216, %v1212
    %v1218 = vmul.f32 1.0, %v1217
    %v1219 = vtanh.pop %v1199
    %v1220 = vmul.f32 %v1218, %v1164
    %1222 = vrot.lane.b32.xlu0 %v1219, 32
    %v1223 = vpop.permute.xlu0 %1222
    %v1225 = vmul.f32 %v1218, %v1223
    %1227 = vrot.lane.b32.xlu0 %v1225, 32
    %v1228 = vpop.permute.xlu0 %1227
    %v1230 = vadd.f32 %v1220, %v1228
    %v1231 = vtanh.pop %v1230
    %1233 = vrot.lane.b32.xlu0 %v1231, 32
    %v1234 = vpop.permute.xlu0 %1233
    %v1236 = vmul.f32 %v1218, %v1234
    %1238 = vrot.lane.b32.xlu0 %v1236, 64
    %v1239 = vpop.permute.xlu0 %1238
    %1241 = vst.msk [vmem:[%s632] sm:$0xf] %vm224, %v1239
    %v1242 = vld [vmem:[%s634] sm:$0xf]
    %v1243 = vsel %vm154, %v1239, 0
    %1245 = vmatpush.msra.mxu0 0.0
    %1246 = vmatpush.msra.mxu0 0.0
    %1247 = vmatpush.msra.mxu0 0.0
    %1248 = vmatpush.msra.mxu0 0.0
    %1249 = vmatpush.msra.mxu0 0.0
    %1250 = vmatpush.msra.mxu0 0.0
    %1251 = vmatpush.msra.mxu0 0.0
    %1252 = vmatpush.msra.mxu0 0.0
    %1253 = vmatpush.msra.mxu0 0.0
    %1254 = vmatpush.msra.mxu0 0.0
    %1255 = vmatpush.msra.mxu0 0.0
    %1256 = vmatpush.msra.mxu0 0.0
    %1257 = vmatpush.msra.mxu0 %v770
    %1258 = vmatpush.msra.mxu0 %v769
    %1259 = vmatpush.msra.mxu0 %v768
    %1260 = vmatpush.msra.mxu0 %v767
    %1261 = vmatmul.f32.gmra.mxu0 %v1243
    %v1262 = vpop.f32.mrf.mxu0
    %v1263 = vadd.f32 0.0, %v1262
    %1264 = vdwg.mxu0
    %v1265 = vadd.f32 %v1242, %v1263
    %v1266 = vxor.u32 %v1265, 2147483648
    %v1267 = vmul.f32 %v1266, 1.442695
    %v1268 = vpow.pop %v1267
    %v1269 = vadd.f32 %v1268, 1.0
    %v1270 = vrcp.pop %v1269
    %v1271 = vmul.f32 %v1269, %v1270
    %v1272 = vsub.f32 1.0, %v1271
    %v1273 = vmul.f32 %v1270, %v1272
    %v1274 = vadd.f32 %v1270, %v1273
    %vm1275 = vweird.f32 %v1269
    %vm1276 = vweird.f32 %v1270
    %vm1277 = vmor %vm1275, %vm1276
    %v1278 = vsel %vm1277, %v1270, %v1274
    %v1279 = vand.u32 2147483647, %v1269
    %vm1280 = vcmp.eq.f32.partialorder %v1279, 8.507059e+37
    %v1281 = vand.u32 %v1269, 2147483648
    %v1282 = vor.u32 1.1754944e-38, %v1281
    %v1283 = vsel %vm1280, %v1282, %v1278
    %v1284 = vmul.f32 1.0, %v1283
    %v1285 = vtanh.pop %v1265
    %v1286 = vmul.f32 %v1284, %v1230
    %1288 = vrot.lane.b32.xlu0 %v1285, 32
    %v1289 = vpop.permute.xlu0 %1288
    %v1291 = vmul.f32 %v1284, %v1289
    %1293 = vrot.lane.b32.xlu0 %v1291, 32
    %v1294 = vpop.permute.xlu0 %1293
    %v1296 = vadd.f32 %v1286, %v1294
    %v1297 = vtanh.pop %v1296
    %1299 = vrot.lane.b32.xlu0 %v1297, 32
    %v1300 = vpop.permute.xlu0 %1299
    %v1302 = vmul.f32 %v1284, %v1300
    %1304 = vrot.lane.b32.xlu0 %v1302, 64
    %v1305 = vpop.permute.xlu0 %1304
    %1307 = vst.msk [vmem:[%s700] sm:$0xf] %vm224, %v1305
    %1308 = vst.msk [vmem:[%s771] sm:$0xf] %vm224, %v1305
    %1310 = vrot.lane.b32.xlu0 %v1296, 96
    %v1311 = vpop.permute.xlu0 %1310
    %1313 = vst.msk [vmem:[%s773] sm:$0xf] %vm224, %v1311
    %v1314 = vld [vmem:[#allocation2] sm:$0xff]
    %v1315 = vld [vmem:[#allocation2 + $0x8] sm:$0xff]
    %v1316 = vld [vmem:[#allocation2 + $0x10] sm:$0xff]
    %v1317 = vld [vmem:[#allocation2 + $0x18] sm:$0xff]
    %1318 = vst.msk [vmem:[#allocation12] sm:$0xff] %vm154, %v1314
    %1319 = vst.msk [vmem:[#allocation12 + $0x8] sm:$0xff] %vm154, %v1315
    %1320 = vst.msk [vmem:[#allocation12 + $0x10] sm:$0xff] %vm154, %v1316
    %1321 = vst.msk [vmem:[#allocation12 + $0x18] sm:$0xff] %vm154, %v1317
    // Predicated region
    $region46: #{tpu_custom_call.1} parent=1 // pred_check
      %p1322 = pneg %p78
    $region47: #{tpu_custom_call.1} parent=1 // pred_check_branch
      %1324 = sbr.rel (%p1322) target = $region49
    $region48: #{tpu_custom_call.1} parent=1 // pred_region
      %v1325 = vld [vmem:[#allocation4] sm:$0xf]
      %v1326 = vld [vmem:[#allocation4 + $0x4] sm:$0xf]
      %1327 = vst.msk [vmem:[#allocation13] sm:$0xf] %vm224, %v1325
      %1328 = vst.msk [vmem:[#allocation13 + $0x4] sm:$0xf] %vm224, %v1326
      %v1329 = vld [vmem:[#allocation5] sm:$0xf]
      %v1330 = vld [vmem:[#allocation5 + $0x4] sm:$0xf]
      %1331 = vst.msk [vmem:[#allocation15] sm:$0xf] %vm224, %v1329
      %1332 = vst.msk [vmem:[#allocation15 + $0x4] sm:$0xf] %vm224, %v1330
    $region49: #{tpu_custom_call.1} parent=1 // pred_fallthru
      _
    // Predicated region
    $region50: #{tpu_custom_call.1} parent=1 // pred_check
      _
    $region51: #{tpu_custom_call.1} parent=1 // pred_check_branch
      %1334 = sbr.rel (0) target = $region53
    $region52: #{tpu_custom_call.1} parent=1 // pred_region
      %1336 = vsyncadd [#allocation8], 0
      %s1337 = sshll.u32 [#allocation12], 4
      %s1338 = int_to_ptr.vmem [resolvable:$true] %s1337
      %s1339 = sshll.u32 %s7, 4
      %s1340 = int_to_ptr.hbm [resolvable:$true] %s1339
      %1345 = dma.vmem_to_hbm [thread:$0]  %s1338, 512, %s1340, [#allocation8], 128, 128, 8
    $region53: #{tpu_custom_call.1} parent=1 // pred_fallthru
      _
    // Predicated region
    $region54: #{tpu_custom_call.1} parent=1 // pred_check
      _
    $region55: #{tpu_custom_call.1} parent=1 // pred_check_branch
      %1347 = sbr.rel (0) target = $region57
    $region56: #{tpu_custom_call.1} parent=1 // pred_region
      %1349 = vsyncadd [#allocation14], 0
      %s1350 = sshll.u32 [#allocation13], 4
      %s1351 = int_to_ptr.vmem [resolvable:$true] %s1350
      %s1352 = sshll.u32 %s8, 4
      %s1353 = int_to_ptr.hbm [resolvable:$true] %s1352
      %1358 = dma.vmem_to_hbm [thread:$0]  %s1351, 128, %s1353, [#allocation14], 64, 64, 4
    $region57: #{tpu_custom_call.1} parent=1 // pred_fallthru
      _
    // Predicated region
    $region58: #{tpu_custom_call.1} parent=1 // pred_check
      _
    $region59: #{tpu_custom_call.1} parent=1 // pred_check_branch
      %1360 = sbr.rel (0) target = $region61
    $region60: #{tpu_custom_call.1} parent=1 // pred_region
      %1362 = vsyncadd [#allocation14], 0
      %s1363 = sshll.u32 [#allocation15], 4
      %s1364 = int_to_ptr.vmem [resolvable:$true] %s1363
      %s1365 = sshll.u32 %s9, 4
      %s1366 = int_to_ptr.hbm [resolvable:$true] %s1365
      %1371 = dma.vmem_to_hbm [thread:$0]  %s1364, 128, %s1366, [#allocation14], 64, 64, 4
    $region61: #{tpu_custom_call.1} parent=1 // pred_fallthru
      _
    // Predicated region
    $region62: #{tpu_custom_call.1} parent=1 // pred_check
      _
    $region63: #{tpu_custom_call.1} parent=1 // pred_check_branch
      %1373 = sbr.rel (0) target = $region65
    $region64: #{tpu_custom_call.1} parent=1 // pred_region
      %1375 = dma.done [#allocation8], 512
    $region65: #{tpu_custom_call.1} parent=1 // pred_fallthru
      _
    // Predicated region
    $region66: #{tpu_custom_call.1} parent=1 // pred_check
      _
    $region67: #{tpu_custom_call.1} parent=1 // pred_check_branch
      %1377 = sbr.rel (0) target = $region69
    $region68: #{tpu_custom_call.1} parent=1 // pred_region
      %1379 = dma.done [#allocation14], 128
    $region69: #{tpu_custom_call.1} parent=1 // pred_fallthru
      _
    // Predicated region
    $region70: #{tpu_custom_call.1} parent=1 // pred_check
      _
    $region71: #{tpu_custom_call.1} parent=1 // pred_check_branch
      %1381 = sbr.rel (0) target = $region73
    $region72: #{tpu_custom_call.1} parent=1 // pred_region
      %1383 = dma.done [#allocation14], 128
    $region73: #{tpu_custom_call.1} parent=1 // pred_fallthru
      _
    %1384 = vsyncpa [#allocation7], 1
    %1385 = vsyncpa [#allocation10], 1
    %1386 = vsyncpa [#allocation8], 1
    %1387 = vsyncpa [#allocation14], 1

</llo_original>
